<compile_context>
chip_gen: v7x
topology: tpu7x:2x2x1
jax: 0.10.0
libtpu: 0.0.40
codegen_flags: <defaults>
</compile_context>

<pallas_src>
import jax
import jax.numpy as jnp
from jax.experimental import pallas as pl
from jax.experimental.pallas import tpu as pltpu


def residual_kernel(x_ref, w3_ref, w1_ref, o_ref, xpad_ref, patches_ref):
    # x_ref      : (1, H, W, C)     input tile (the ONLY HBM read of x)
    # w3_ref     : (9*C, Cout)      3x3 conv weights, rows ordered (dh, dw, ci)
    # w1_ref     : (C, Cout)        1x1 conv weights
    # o_ref      : (1, H*W, Cout)   output tile
    # xpad_ref   : VMEM (H+2, W+2, C)  zero-halo padded copy of x
    # patches_ref: VMEM (H*W, 9*C)     im2col patch matrix
    _, H, W, C = x_ref.shape
    Cout = w1_ref.shape[1]

    x = x_ref[0]                                        # (H, W, C)

    # Build the zero-padded tile in VMEM: zero halo, copy interior.
    xpad_ref[...] = jnp.zeros_like(xpad_ref)
    xpad_ref[1:H + 1, 1:W + 1, :] = x.astype(xpad_ref.dtype)
    xp = xpad_ref[...]                                  # (H+2, W+2, C)

    # im2col: assemble (H*W, 9*C) patch matrix -> one fat MXU contraction.
    for k in range(9):
        dh, dw = k // 3, k % 3
        patches_ref[:, k * C:(k + 1) * C] = (
            xp[dh:dh + H, dw:dw + W, :].reshape(H * W, C))
    patches = patches_ref[...]                          # (H*W, 9*C)

    # 3x3 conv as a single matmul, f32 accumulation, then ReLU (f32).
    h = jnp.dot(patches, w3_ref[...], preferred_element_type=jnp.float32)
    h = jnp.maximum(h, 0.0)

    # 1x1 conv == matmul over channels (f32 accumulation).
    y = jnp.dot(h.astype(w1_ref.dtype), w1_ref[...],
                preferred_element_type=jnp.float32)

    # Residual add in f32, store.
    out = x.reshape(H * W, C).astype(jnp.float32) + y
    o_ref[...] = out.astype(o_ref.dtype)[None]


def residual_layer(x_nhwc, w3, w1, *, matmul_dtype=None):
    """x_nhwc: (N, H, W, Cin); w3: (3, 3, Cin, Cout) HWIO; w1: (Cin, Cout).

    matmul_dtype: dtype for MXU operands (e.g. jnp.bfloat16 on v6e/v7x).
    Accumulation / ReLU / residual stay in float32. Default: input dtype.
    """
    N, H, W, C = x_nhwc.shape
    Cout = w1.shape[1]
    assert w3.shape == (3, 3, C, Cout)
    assert C == Cout, "residual add requires in_channels == out_channels"

    mdtype = (jnp.dtype(x_nhwc.dtype) if matmul_dtype is None
              else jnp.dtype(matmul_dtype))

    # (3,3,Cin,Cout) -> (9*Cin, Cout); row order (dh, dw, ci) matches the
    # im2col column order built inside the kernel.
    w3_flat = w3.reshape(9 * C, Cout).astype(mdtype)
    w1_m = w1.astype(mdtype)

    out_dtype = x_nhwc.dtype
    io_item = jnp.dtype(out_dtype).itemsize
    flops = 2 * N * H * W * (9 * C + Cout) * Cout
    bytes_accessed = int(
        N * H * W * C * io_item            # x, read once
        + N * H * W * Cout * io_item       # output
        + 9 * C * Cout * mdtype.itemsize   # w3
        + C * Cout * mdtype.itemsize)      # w1
    cost = pl.CostEstimate(flops=flops, transcendentals=0,
                           bytes_accessed=bytes_accessed)

    out_flat = pl.pallas_call(
        residual_kernel,
        out_shape=jax.ShapeDtypeStruct((N, H * W, Cout), out_dtype),
        grid=(N,),
        in_specs=[
            pl.BlockSpec((1, H, W, C), lambda n: (n, 0, 0, 0)),
            pl.BlockSpec((9 * C, Cout), lambda n: (0, 0)),
            pl.BlockSpec((C, Cout), lambda n: (0, 0)),
        ],
        out_specs=pl.BlockSpec((1, H * W, Cout), lambda n: (n, 0, 0)),
        scratch_shapes=[
            pltpu.VMEM((H + 2, W + 2, C), mdtype),   # zero-halo padded tile
            pltpu.VMEM((H * W, 9 * C), mdtype),      # im2col patch matrix
        ],
        compiler_params=pltpu.CompilerParams(
            dimension_semantics=("parallel",),
            vmem_limit_bytes=32 * 1024 * 1024,
        ),
        cost_estimate=cost,
    )(x_nhwc, w3_flat, w1_m)

    return out_flat.reshape(N, H, W, Cout)


def reference_residual_layer(x_nhwc, w3, w1):
    """Pure-JAX reference (lax conv) matching the PyTorch forward."""
    h = jax.lax.conv_general_dilated(
        x_nhwc, w3, window_strides=(1, 1), padding="SAME",
        dimension_numbers=("NHWC", "HWIO", "NHWC"),
    )
    h = jnp.maximum(h, 0.0)
    y = jax.lax.conv_general_dilated(
        h, w1[None, None, :, :], window_strides=(1, 1), padding="VALID",
        dimension_numbers=("NHWC", "HWIO", "NHWC"),
    )
    return x_nhwc + y


if __name__ == "__main__":
    # Small shapes consistent with the module: batch=2, channels=4, spatial=16
    N, C, H, W = 2, 4, 16, 16

    key = jax.random.PRNGKey(0)
    kx, kw3, kw1 = jax.random.split(key, 3)

    # PyTorch input is NCHW; build it that way, then go to NHWC for the kernel.
    x_nchw = jax.random.normal(kx, (N, C, H, W), jnp.float32)
    x_nhwc = jnp.transpose(x_nchw, (0, 2, 3, 1))

    # Deterministic synthetic weights (no bias, per the module), stored as
    # HWIO for the 3x3 conv and (Cin, Cout) for the 1x1 conv.
    w3 = jax.random.normal(kw3, (3, 3, C, C), jnp.float32) * 0.1
    w1 = jax.random.normal(kw1, (C, C), jnp.float32) * 0.1

    # f32 MXU operands for the demo so the tight tolerance check holds.
    # On v6e/v7x, pass matmul_dtype=jnp.bfloat16 for ~2x MXU throughput.
    out = residual_layer(x_nhwc, w3, w1)
    out = jax.block_until_ready(out)

    ref = reference_residual_layer(x_nhwc, w3, w1)
    assert out.shape == (N, H, W, C)
    assert jnp.allclose(out, ref, atol=1e-5, rtol=1e-5), "mismatch vs reference"

    print("KERNEL_OK")
</pallas_src>

<mosaic_0001>
module attributes {stable_mosaic.version = 11 : i64} {
  func.func @residual_kernel(%arg0: i32, %arg1: memref<1x16x16x4xf32, #tpu.memory_space<vmem>>, %arg2: memref<36x4xf32, #tpu.memory_space<vmem>>, %arg3: memref<4x4xf32, #tpu.memory_space<vmem>>, %arg4: memref<1x256x4xf32, #tpu.memory_space<vmem>>, %arg5: memref<18x18x4xf32, #tpu.memory_space<vmem>>, %arg6: memref<256x36xf32, #tpu.memory_space<vmem>>) attributes {dimension_semantics = [#tpu.dimension_semantics<parallel>], iteration_bounds = array<i64: 2>, scalar_prefetch = 0 : i64, scratch_operands = 2 : i64, tpu.core_type = #tpu.core_type<tc>, window_params = [{transform_indices = @transform_0, window_bounds = array<i64: 1, 16, 16, 4>}, {pipeline_mode = #tpu.pipeline_mode<synchronous>, transform_indices = @transform_1, window_bounds = array<i64: 36, 4>}, {pipeline_mode = #tpu.pipeline_mode<synchronous>, transform_indices = @transform_2, window_bounds = array<i64: 4, 4>}, {transform_indices = @transform_3, window_bounds = array<i64: 1, 256, 4>}]} {
    %c0 = arith.constant 0 : index
    %c0_0 = arith.constant 0 : index
    %c0_1 = arith.constant 0 : index
    %c0_2 = arith.constant 0 : index
    %0 = vector.load %arg1[%c0, %c0_0, %c0_1, %c0_2] : memref<1x16x16x4xf32, #tpu.memory_space<vmem>>, vector<1x16x16x4xf32>
    %1 = vector.shape_cast %0 : vector<1x16x16x4xf32> to vector<16x16x4xf32>
    %cst = arith.constant 0.000000e+00 : f32
    %2 = vector.broadcast %cst : f32 to vector<18x18x4xf32>
    %c0_3 = arith.constant 0 : index
    %c0_4 = arith.constant 0 : index
    %c0_5 = arith.constant 0 : index
    %3 = vector.load %arg5[%c0_3, %c0_4, %c0_5] : memref<18x18x4xf32, #tpu.memory_space<vmem>>, vector<18x18x4xf32>
    tpu.vector_store %arg5[%c0_3, %c0_4, %c0_5], %2 {strides = array<i32>} : memref<18x18x4xf32, #tpu.memory_space<vmem>>, vector<18x18x4xf32>,
    %c1 = arith.constant 1 : index
    %c1_6 = arith.constant 1 : index
    %c0_7 = arith.constant 0 : index
    %4 = vector.load %arg5[%c1, %c1_6, %c0_7] : memref<18x18x4xf32, #tpu.memory_space<vmem>>, vector<16x16x4xf32>
    tpu.vector_store %arg5[%c1, %c1_6, %c0_7], %1 {strides = array<i32>} : memref<18x18x4xf32, #tpu.memory_space<vmem>>, vector<16x16x4xf32>,
    %c0_8 = arith.constant 0 : index
    %c0_9 = arith.constant 0 : index
    %c0_10 = arith.constant 0 : index
    %5 = vector.load %arg5[%c0_8, %c0_9, %c0_10] : memref<18x18x4xf32, #tpu.memory_space<vmem>>, vector<18x18x4xf32>
    %6 = vector.extract_strided_slice %5 {offsets = [0, 0, 0], sizes = [16, 16, 4], strides = [1, 1, 1]} : vector<18x18x4xf32> to vector<16x16x4xf32>
    %7 = vector.shape_cast %6 : vector<16x16x4xf32> to vector<256x4xf32>
    %c0_11 = arith.constant 0 : index
    %c0_12 = arith.constant 0 : index
    %8 = vector.load %arg6[%c0_11, %c0_12] : memref<256x36xf32, #tpu.memory_space<vmem>>, vector<256x4xf32>
    tpu.vector_store %arg6[%c0_11, %c0_12], %7 {strides = array<i32>} : memref<256x36xf32, #tpu.memory_space<vmem>>, vector<256x4xf32>,
    %9 = vector.extract_strided_slice %5 {offsets = [0, 1, 0], sizes = [16, 16, 4], strides = [1, 1, 1]} : vector<18x18x4xf32> to vector<16x16x4xf32>
    %10 = vector.shape_cast %9 : vector<16x16x4xf32> to vector<256x4xf32>
    %c0_13 = arith.constant 0 : index
    %c4 = arith.constant 4 : index
    %11 = vector.load %arg6[%c0_13, %c4] : memref<256x36xf32, #tpu.memory_space<vmem>>, vector<256x4xf32>
    tpu.vector_store %arg6[%c0_13, %c4], %10 {strides = array<i32>} : memref<256x36xf32, #tpu.memory_space<vmem>>, vector<256x4xf32>,
    %12 = vector.extract_strided_slice %5 {offsets = [0, 2, 0], sizes = [16, 16, 4], strides = [1, 1, 1]} : vector<18x18x4xf32> to vector<16x16x4xf32>
    %13 = vector.shape_cast %12 : vector<16x16x4xf32> to vector<256x4xf32>
    %c0_14 = arith.constant 0 : index
    %c8 = arith.constant 8 : index
    %14 = vector.load %arg6[%c0_14, %c8] : memref<256x36xf32, #tpu.memory_space<vmem>>, vector<256x4xf32>
    tpu.vector_store %arg6[%c0_14, %c8], %13 {strides = array<i32>} : memref<256x36xf32, #tpu.memory_space<vmem>>, vector<256x4xf32>,
    %15 = vector.extract_strided_slice %5 {offsets = [1, 0, 0], sizes = [16, 16, 4], strides = [1, 1, 1]} : vector<18x18x4xf32> to vector<16x16x4xf32>
    %16 = vector.shape_cast %15 : vector<16x16x4xf32> to vector<256x4xf32>
    %c0_15 = arith.constant 0 : index
    %c12 = arith.constant 12 : index
    %17 = vector.load %arg6[%c0_15, %c12] : memref<256x36xf32, #tpu.memory_space<vmem>>, vector<256x4xf32>
    tpu.vector_store %arg6[%c0_15, %c12], %16 {strides = array<i32>} : memref<256x36xf32, #tpu.memory_space<vmem>>, vector<256x4xf32>,
    %18 = vector.extract_strided_slice %5 {offsets = [1, 1, 0], sizes = [16, 16, 4], strides = [1, 1, 1]} : vector<18x18x4xf32> to vector<16x16x4xf32>
    %19 = vector.shape_cast %18 : vector<16x16x4xf32> to vector<256x4xf32>
    %c0_16 = arith.constant 0 : index
    %c16 = arith.constant 16 : index
    %20 = vector.load %arg6[%c0_16, %c16] : memref<256x36xf32, #tpu.memory_space<vmem>>, vector<256x4xf32>
    tpu.vector_store %arg6[%c0_16, %c16], %19 {strides = array<i32>} : memref<256x36xf32, #tpu.memory_space<vmem>>, vector<256x4xf32>,
    %21 = vector.extract_strided_slice %5 {offsets = [1, 2, 0], sizes = [16, 16, 4], strides = [1, 1, 1]} : vector<18x18x4xf32> to vector<16x16x4xf32>
    %22 = vector.shape_cast %21 : vector<16x16x4xf32> to vector<256x4xf32>
    %c0_17 = arith.constant 0 : index
    %c20 = arith.constant 20 : index
    %23 = vector.load %arg6[%c0_17, %c20] : memref<256x36xf32, #tpu.memory_space<vmem>>, vector<256x4xf32>
    tpu.vector_store %arg6[%c0_17, %c20], %22 {strides = array<i32>} : memref<256x36xf32, #tpu.memory_space<vmem>>, vector<256x4xf32>,
    %24 = vector.extract_strided_slice %5 {offsets = [2, 0, 0], sizes = [16, 16, 4], strides = [1, 1, 1]} : vector<18x18x4xf32> to vector<16x16x4xf32>
    %25 = vector.shape_cast %24 : vector<16x16x4xf32> to vector<256x4xf32>
    %c0_18 = arith.constant 0 : index
    %c24 = arith.constant 24 : index
    %26 = vector.load %arg6[%c0_18, %c24] : memref<256x36xf32, #tpu.memory_space<vmem>>, vector<256x4xf32>
    tpu.vector_store %arg6[%c0_18, %c24], %25 {strides = array<i32>} : memref<256x36xf32, #tpu.memory_space<vmem>>, vector<256x4xf32>,
    %27 = vector.extract_strided_slice %5 {offsets = [2, 1, 0], sizes = [16, 16, 4], strides = [1, 1, 1]} : vector<18x18x4xf32> to vector<16x16x4xf32>
    %28 = vector.shape_cast %27 : vector<16x16x4xf32> to vector<256x4xf32>
    %c0_19 = arith.constant 0 : index
    %c28 = arith.constant 28 : index
    %29 = vector.load %arg6[%c0_19, %c28] : memref<256x36xf32, #tpu.memory_space<vmem>>, vector<256x4xf32>
    tpu.vector_store %arg6[%c0_19, %c28], %28 {strides = array<i32>} : memref<256x36xf32, #tpu.memory_space<vmem>>, vector<256x4xf32>,
    %30 = vector.extract_strided_slice %5 {offsets = [2, 2, 0], sizes = [16, 16, 4], strides = [1, 1, 1]} : vector<18x18x4xf32> to vector<16x16x4xf32>
    %31 = vector.shape_cast %30 : vector<16x16x4xf32> to vector<256x4xf32>
    %c0_20 = arith.constant 0 : index
    %c32 = arith.constant 32 : index
    %32 = vector.load %arg6[%c0_20, %c32] : memref<256x36xf32, #tpu.memory_space<vmem>>, vector<256x4xf32>
    tpu.vector_store %arg6[%c0_20, %c32], %31 {strides = array<i32>} : memref<256x36xf32, #tpu.memory_space<vmem>>, vector<256x4xf32>,
    %c0_21 = arith.constant 0 : index
    %c0_22 = arith.constant 0 : index
    %33 = vector.load %arg6[%c0_21, %c0_22] : memref<256x36xf32, #tpu.memory_space<vmem>>, vector<256x36xf32>
    %c0_23 = arith.constant 0 : index
    %c0_24 = arith.constant 0 : index
    %34 = vector.load %arg2[%c0_23, %c0_24] : memref<36x4xf32, #tpu.memory_space<vmem>>, vector<36x4xf32>
    %cst_25 = arith.constant dense<0.000000e+00> : vector<256x4xf32>
    %35 = tpu.matmul %33, %34, %cst_25 {dimension_numbers = #tpu.dot_dimension_numbers<[1], [0], [0], [1], [0, 0, 1, 1], [], []>} : vector<256x36xf32>, vector<36x4xf32>, vector<256x4xf32> -> vector<256x4xf32>
    %cst_26 = arith.constant 0.000000e+00 : f32
    %36 = vector.broadcast %cst_26 : f32 to vector<256x4xf32>
    %37 = arith.maximumf %35, %36 : vector<256x4xf32>
    %c0_27 = arith.constant 0 : index
    %c0_28 = arith.constant 0 : index
    %38 = vector.load %arg3[%c0_27, %c0_28] : memref<4x4xf32, #tpu.memory_space<vmem>>, vector<4x4xf32>
    %cst_29 = arith.constant dense<0.000000e+00> : vector<256x4xf32>
    %39 = tpu.matmul %37, %38, %cst_29 {dimension_numbers = #tpu.dot_dimension_numbers<[1], [0], [0], [1], [0, 0, 1, 1], [], []>} : vector<256x4xf32>, vector<4x4xf32>, vector<256x4xf32> -> vector<256x4xf32>
    %40 = vector.shape_cast %1 : vector<16x16x4xf32> to vector<256x4xf32>
    %41 = arith.addf %40, %39 : vector<256x4xf32>
    %42 = vector.shape_cast %41 : vector<256x4xf32> to vector<1x256x4xf32>
    %c0_30 = arith.constant 0 : index
    %c0_31 = arith.constant 0 : index
    %c0_32 = arith.constant 0 : index
    %43 = vector.load %arg4[%c0_30, %c0_31, %c0_32] : memref<1x256x4xf32, #tpu.memory_space<vmem>>, vector<1x256x4xf32>
    tpu.vector_store %arg4[%c0_30, %c0_31, %c0_32], %42 {strides = array<i32>} : memref<1x256x4xf32, #tpu.memory_space<vmem>>, vector<1x256x4xf32>,
    return
  }
  func.func @transform_0(%arg0: i32) -> (i32, i32, i32, i32) {
    %c0_i32 = arith.constant 0 : i32
    %c0_i32_0 = arith.constant 0 : i32
    %c0_i32_1 = arith.constant 0 : i32
    %c0_i32_2 = arith.constant 0 : i32
    return %arg0, %c0_i32, %c0_i32_0, %c0_i32_1 : i32, i32, i32, i32
  }
  func.func @transform_1(%arg0: i32) -> (i32, i32) {
    %c0_i32 = arith.constant 0 : i32
    %c0_i32_0 = arith.constant 0 : i32
    %c0_i32_1 = arith.constant 0 : i32
    return %c0_i32, %c0_i32_0 : i32, i32
  }
  func.func @transform_2(%arg0: i32) -> (i32, i32) {
    %c0_i32 = arith.constant 0 : i32
    %c0_i32_0 = arith.constant 0 : i32
    %c0_i32_1 = arith.constant 0 : i32
    return %c0_i32, %c0_i32_0 : i32, i32
  }
  func.func @transform_3(%arg0: i32) -> (i32, i32, i32) {
    %c0_i32 = arith.constant 0 : i32
    %c0_i32_0 = arith.constant 0 : i32
    %c0_i32_1 = arith.constant 0 : i32
    return %arg0, %c0_i32, %c0_i32_0 : i32, i32, i32
  }
}

</mosaic_0001>

<llo_original>
// kernel: tpu_custom_call.1
$region0: #{tpu_custom_call.1}
  #allocation0 [shape = 'u32[]', space=smem, size = 0x4, offset = 0x4, fixed_abs, tag = 'smem constant byte address 0x4 - core index']
  #allocation1 [shape = 'u32[144,128]{1,0:T(1,128)}', space=vmem, size = 0x12000, scoped, tag = 'internal scratch']
  #allocation2 [shape = 'f32[18,18,4]{2,1,0:T(8,128)}', space=vmem, size = 0x36000, scoped, tag = 'scratch operand']
  #allocation3 [shape = 'f32[256,36]{1,0:T(8,128)}', space=vmem, size = 0x20000, scoped, tag = 'scratch operand']
  %s0 = inlined_call_operand.vmem [shape: f32[2,16,16,4], index: 0, kind: input, shape index: {}]
  %s1 = inlined_call_operand.vmem [shape: f32[36,4], index: 1, kind: input, shape index: {}]
  %s2 = inlined_call_operand.vmem [shape: f32[4,4], index: 2, kind: input, shape index: {}]
  %s3 = inlined_call_operand.vmem [shape: f32[2,256,4], index: 3, kind: output, shape index: {}]
  %s4 = sld [smem:[#allocation0]]
  $region45: #{tpu_custom_call.1} parent=0
    _
  %s6 = ssub.s32 1, %s4
  %s7 = scalar_select 0, %s6, %s4
  loop: start=0, step=1, limit=4
  $region2: #{tpu_custom_call.1} parent=0 // loop_pre_header
    _
  $region3: #{tpu_custom_call.1} parent=0 // loop_header
    %s9 = sphi 0, %s13
    %p10 = scmp.ge.s32.totalorder %s9, 4
    %s19 = sphi 0, %s21
    %s22 = sphi 0, %s19
    %s23 = sphi 0, %s22
    %s39 = sphi 0, %s23
    %s43 = sphi 0, %s43
    %s45 = sphi 0, %s43
    %s46 = sphi 0, %s45
    %s60 = sphi 0, %s46
    %s64 = sphi 0, %s64
    %s66 = sphi 0, %s64
    %s67 = sphi 0, %s66
    %s81 = sphi 0, %s67
    %s87 = sphi 0, %s89
    %s90 = sphi 0, %s87
    %s91 = sphi 0, %s90
    %s107 = sphi 0, %s91
  $region4: #{tpu_custom_call.1} parent=0 // loop_header_branch
    %12 = sbr.rel (%p10) target = $region8
  $region5: #{tpu_custom_call.1} parent=0 // loop_body
    %s14 = ssub.s32 %s9, 1
    %s15 = ssub.s32 %s9, 2
    %s16 = sadd.s32 %s9, 1
    %s17 = ssub.s32 %s9, %s16
    %p18 = scmp.eq.s32.totalorder %s17, 0
    %s20 = sadd.s32 %s19, 1
    %s21 = scalar_select %p18, %s19, %s20
    %p24 = pneg %p18
    %p25 = scmp.eq.s32.totalorder %s9, 1
    %p26 = por %p24, %p25
    %p27 = scmp.ne.s32.totalorder %s19, %s22
    %p28 = scmp.eq.s32.totalorder %s9, 0
    %p29 = por %p27, %p28
    %p30 = scmp.ne.s32.totalorder %s19, %s22
    %p31 = scmp.eq.s32.totalorder %s14, 1
    %p32 = por %p30, %p31
    %p33 = scmp.ne.s32.totalorder %s22, %s23
    %p34 = scmp.eq.s32.totalorder %s14, 0
    %p35 = por %p33, %p34
    %p36 = scmp.ne.s32.totalorder %s22, %s23
    %p37 = scmp.eq.s32.totalorder %s15, 1
    %p38 = por %p36, %p37
    %p40 = scmp.ne.s32.totalorder %s23, %s39
    %p41 = scmp.eq.s32.totalorder %s15, 0
    %p42 = por %p40, %p41
    %s44 = sadd.s32 %s43, 1
    %p47 = scmp.eq.s32.totalorder %s9, 1
    %p48 = scmp.ne.s32.totalorder %s43, %s45
    %p49 = scmp.eq.s32.totalorder %s9, 0
    %p50 = por %p48, %p49
    %p51 = scmp.ne.s32.totalorder %s43, %s45
    %p52 = scmp.eq.s32.totalorder %s14, 1
    %p53 = por %p51, %p52
    %p54 = scmp.ne.s32.totalorder %s45, %s46
    %p55 = scmp.eq.s32.totalorder %s14, 0
    %p56 = por %p54, %p55
    %p57 = scmp.ne.s32.totalorder %s45, %s46
    %p58 = scmp.eq.s32.totalorder %s15, 1
    %p59 = por %p57, %p58
    %p61 = scmp.ne.s32.totalorder %s46, %s60
    %p62 = scmp.eq.s32.totalorder %s15, 0
    %p63 = por %p61, %p62
    %s65 = sadd.s32 %s64, 1
    %p68 = scmp.eq.s32.totalorder %s9, 1
    %p69 = scmp.ne.s32.totalorder %s64, %s66
    %p70 = scmp.eq.s32.totalorder %s9, 0
    %p71 = por %p69, %p70
    %p72 = scmp.ne.s32.totalorder %s64, %s66
    %p73 = scmp.eq.s32.totalorder %s14, 1
    %p74 = por %p72, %p73
    %p75 = scmp.ne.s32.totalorder %s66, %s67
    %p76 = scmp.eq.s32.totalorder %s14, 0
    %p77 = por %p75, %p76
    %p78 = scmp.ne.s32.totalorder %s66, %s67
    %p79 = scmp.eq.s32.totalorder %s15, 1
    %p80 = por %p78, %p79
    %p82 = scmp.ne.s32.totalorder %s67, %s81
    %p83 = scmp.eq.s32.totalorder %s15, 0
    %p84 = por %p82, %p83
    %s85 = ssub.s32 %s9, %s16
    %p86 = scmp.eq.s32.totalorder %s85, 0
    %s88 = sadd.s32 %s87, 1
    %s89 = scalar_select %p86, %s87, %s88
    %p92 = pneg %p86
    %p93 = scmp.eq.s32.totalorder %s9, 1
    %p94 = por %p92, %p93
    %p95 = scmp.ne.s32.totalorder %s87, %s90
    %p96 = scmp.eq.s32.totalorder %s9, 0
    %p97 = por %p95, %p96
    %p98 = scmp.ne.s32.totalorder %s87, %s90
    %p99 = scmp.eq.s32.totalorder %s14, 1
    %p100 = por %p98, %p99
    %p101 = scmp.ne.s32.totalorder %s90, %s91
    %p102 = scmp.eq.s32.totalorder %s14, 0
    %p103 = por %p101, %p102
    %p104 = scmp.ne.s32.totalorder %s90, %s91
    %p105 = scmp.eq.s32.totalorder %s15, 1
    %p106 = por %p104, %p105
    %p108 = scmp.ne.s32.totalorder %s91, %s107
    %p109 = scmp.eq.s32.totalorder %s15, 0
    %p110 = por %p108, %p109
    %p111 = scmp.le.s32.totalorder 1, %s9
    %p112 = scmp.lt.s32.totalorder %s9, 3
    %p113 = pnand %p111, %p112
    %p114 = pneg %p113
    // Predicated region
    $region9: #{tpu_custom_call.1} parent=5 // pred_check
      _
    $region10: #{tpu_custom_call.1} parent=5 // pred_check_branch
      %116 = sbr.rel (%p113) target = $region12
    $region11: #{tpu_custom_call.1} parent=5 // pred_region
      %s117 = ssub.s32 %s9, 1
      // Predicated region
      $region13: #{tpu_custom_call.1} parent=11 // pred_check
        %p118 = pneg %p56
      $region14: #{tpu_custom_call.1} parent=11 // pred_check_branch
        %120 = sbr.rel (%p118) target = $region16
      $region15: #{tpu_custom_call.1} parent=11 // pred_region
        _
      $region16: #{tpu_custom_call.1} parent=11 // pred_fallthru
        _
      // Predicated region
      $region17: #{tpu_custom_call.1} parent=11 // pred_check
        %p121 = pneg %p77
      $region18: #{tpu_custom_call.1} parent=11 // pred_check_branch
        %123 = sbr.rel (%p121) target = $region20
      $region19: #{tpu_custom_call.1} parent=11 // pred_region
        _
      $region20: #{tpu_custom_call.1} parent=11 // pred_fallthru
        _
    $region12: #{tpu_custom_call.1} parent=5 // pred_fallthru
      _
    %p124 = scmp.lt.s32.totalorder %s9, 2
    // Predicated region
    $region21: #{tpu_custom_call.1} parent=5 // pred_check
      %p125 = pneg %p124
    $region22: #{tpu_custom_call.1} parent=5 // pred_check_branch
      %127 = sbr.rel (%p125) target = $region24
    $region23: #{tpu_custom_call.1} parent=5 // pred_region
      // Predicated region
      $region25: #{tpu_custom_call.1} parent=23 // pred_check
        %p128 = pneg %p29
      $region26: #{tpu_custom_call.1} parent=23 // pred_check_branch
        %130 = sbr.rel (%p128) target = $region28
      $region27: #{tpu_custom_call.1} parent=23 // pred_region
        %p131 = scmp.lt.s32.totalorder %s9, 1
        %s132 = scalar_select %p131, %s9, 1
        %s133 = smul.addr %s132, 32
        %s134 = smul.addr %s133, 8
        %s135 = scalar_lea.vmem %s0, %s134
      $region28: #{tpu_custom_call.1} parent=23 // pred_fallthru
        _
    $region24: #{tpu_custom_call.1} parent=5 // pred_fallthru
      _
    %p136 = scmp.le.s32.totalorder 1, %s9
    %p137 = scmp.lt.s32.totalorder %s9, 3
    %p138 = pnand %p136, %p137
    %p139 = pneg %p138
    // Predicated region
    $region29: #{tpu_custom_call.1} parent=5 // pred_check
      _
    $region30: #{tpu_custom_call.1} parent=5 // pred_check_branch
      %141 = sbr.rel (%p138) target = $region32
    $region31: #{tpu_custom_call.1} parent=5 // pred_region
      %s142 = ssub.s32 %s9, 1
      %p143 = scmp.lt.s32.totalorder %s14, 1
      %s144 = scalar_select %p143, %s14, 1
      %s145 = smul.addr %s144, 32
      %s146 = smul.addr %s145, 8
      %s147 = scalar_lea.vmem %s0, %s146
      %p148 = pneg %p35
      %p149 = pneg %p32
      %p150 = pneg %p56
      %p151 = pneg %p53
      %p152 = pneg %p77
      %p153 = pneg %p74
      %p154 = pneg %p103
      %p155 = pneg %p100
      %p156 = scmp.lt.s32.totalorder %s14, 1
      %s157 = scalar_select %p156, %s14, 1
      %s158 = smul.addr %s157, 32
      %s159 = smul.addr %s158, 8
      %s160 = scalar_lea.vmem %s3, %s159
      %p161 = scmp.lt.s32.totalorder %s14, 1
      %s162 = scalar_select %p161, %s14, 1
      %s163 = smul.addr %s162, 32
      %s164 = smul.addr %s163, 8
      %s165 = scalar_lea.vmem %s0, %s164
      %p166 = scmp.lt.s32.totalorder %s14, 1
      %s167 = scalar_select %p166, %s14, 1
      %s168 = smul.addr %s167, 32
      %s169 = smul.addr %s168, 8
      %s170 = scalar_lea.vmem %s3, %s169
      %v171 = vld [vmem:[%s165] sm:$0xff]
      %v172 = vld [vmem:[%s165 + $0x8] sm:$0xff]
      %v173 = vld [vmem:[%s165 + $0x10] sm:$0xff]
      %v174 = vld [vmem:[%s165 + $0x18] sm:$0xff]
      %v175 = vld [vmem:[%s165 + $0x20] sm:$0xff]
      %v176 = vld [vmem:[%s165 + $0x28] sm:$0xff]
      %v177 = vld [vmem:[%s165 + $0x30] sm:$0xff]
      %v178 = vld [vmem:[%s165 + $0x38] sm:$0xff]
      %v179 = vld [vmem:[%s165 + $0x40] sm:$0xff]
      %v180 = vld [vmem:[%s165 + $0x48] sm:$0xff]
      %v181 = vld [vmem:[%s165 + $0x50] sm:$0xff]
      %v182 = vld [vmem:[%s165 + $0x58] sm:$0xff]
      %v183 = vld [vmem:[%s165 + $0x60] sm:$0xff]
      %v184 = vld [vmem:[%s165 + $0x68] sm:$0xff]
      %v185 = vld [vmem:[%s165 + $0x70] sm:$0xff]
      %v186 = vld [vmem:[%s165 + $0x78] sm:$0xff]
      %v187 = vld [vmem:[%s165 + $0x80] sm:$0xff]
      %v188 = vld [vmem:[%s165 + $0x88] sm:$0xff]
      %v189 = vld [vmem:[%s165 + $0x90] sm:$0xff]
      %v190 = vld [vmem:[%s165 + $0x98] sm:$0xff]
      %v191 = vld [vmem:[%s165 + $0xa0] sm:$0xff]
      %v192 = vld [vmem:[%s165 + $0xa8] sm:$0xff]
      %v193 = vld [vmem:[%s165 + $0xb0] sm:$0xff]
      %v194 = vld [vmem:[%s165 + $0xb8] sm:$0xff]
      %v195 = vld [vmem:[%s165 + $0xc0] sm:$0xff]
      %v196 = vld [vmem:[%s165 + $0xc8] sm:$0xff]
      %v197 = vld [vmem:[%s165 + $0xd0] sm:$0xff]
      %v198 = vld [vmem:[%s165 + $0xd8] sm:$0xff]
      %v199 = vld [vmem:[%s165 + $0xe0] sm:$0xff]
      %v200 = vld [vmem:[%s165 + $0xe8] sm:$0xff]
      %v201 = vld [vmem:[%s165 + $0xf0] sm:$0xff]
      %v202 = vld [vmem:[%s165 + $0xf8] sm:$0xff]
      %vm203 = vcmask 31744
      %204 = vst.msk [vmem:[#allocation2] sm:$0xff] %vm203, 0.0
      %205 = vst.msk [vmem:[#allocation2 + $0x8] sm:$0xff] %vm203, 0.0
      %vm206 = vcmask 25600
      %207 = vst.msk [vmem:[#allocation2 + $0x10] sm:$0x3] %vm206, 0.0
      %208 = vst.msk [vmem:[#allocation2 + $0x18] sm:$0xff] %vm203, 0.0
      %209 = vst.msk [vmem:[#allocation2 + $0x20] sm:$0xff] %vm203, 0.0
      %210 = vst.msk [vmem:[#allocation2 + $0x28] sm:$0x3] %vm206, 0.0
      %211 = vst.msk [vmem:[#allocation2 + $0x30] sm:$0xff] %vm203, 0.0
      %212 = vst.msk [vmem:[#allocation2 + $0x38] sm:$0xff] %vm203, 0.0
      %213 = vst.msk [vmem:[#allocation2 + $0x40] sm:$0x3] %vm206, 0.0
      %214 = vst.msk [vmem:[#allocation2 + $0x48] sm:$0xff] %vm203, 0.0
      %215 = vst.msk [vmem:[#allocation2 + $0x50] sm:$0xff] %vm203, 0.0
      %216 = vst.msk [vmem:[#allocation2 + $0x58] sm:$0x3] %vm206, 0.0
      %217 = vst.msk [vmem:[#allocation2 + $0x60] sm:$0xff] %vm203, 0.0
      %218 = vst.msk [vmem:[#allocation2 + $0x68] sm:$0xff] %vm203, 0.0
      %219 = vst.msk [vmem:[#allocation2 + $0x70] sm:$0x3] %vm206, 0.0
      %220 = vst.msk [vmem:[#allocation2 + $0x78] sm:$0xff] %vm203, 0.0
      %221 = vst.msk [vmem:[#allocation2 + $0x80] sm:$0xff] %vm203, 0.0
      %222 = vst.msk [vmem:[#allocation2 + $0x88] sm:$0x3] %vm206, 0.0
      %223 = vst.msk [vmem:[#allocation2 + $0x90] sm:$0xff] %vm203, 0.0
      %224 = vst.msk [vmem:[#allocation2 + $0x98] sm:$0xff] %vm203, 0.0
      %225 = vst.msk [vmem:[#allocation2 + $0xa0] sm:$0x3] %vm206, 0.0
      %226 = vst.msk [vmem:[#allocation2 + $0xa8] sm:$0xff] %vm203, 0.0
      %227 = vst.msk [vmem:[#allocation2 + $0xb0] sm:$0xff] %vm203, 0.0
      %228 = vst.msk [vmem:[#allocation2 + $0xb8] sm:$0x3] %vm206, 0.0
      %229 = vst.msk [vmem:[#allocation2 + $0xc0] sm:$0xff] %vm203, 0.0
      %230 = vst.msk [vmem:[#allocation2 + $0xc8] sm:$0xff] %vm203, 0.0
      %231 = vst.msk [vmem:[#allocation2 + $0xd0] sm:$0x3] %vm206, 0.0
      %232 = vst.msk [vmem:[#allocation2 + $0xd8] sm:$0xff] %vm203, 0.0
      %233 = vst.msk [vmem:[#allocation2 + $0xe0] sm:$0xff] %vm203, 0.0
      %234 = vst.msk [vmem:[#allocation2 + $0xe8] sm:$0x3] %vm206, 0.0
      %235 = vst.msk [vmem:[#allocation2 + $0xf0] sm:$0xff] %vm203, 0.0
      %236 = vst.msk [vmem:[#allocation2 + $0xf8] sm:$0xff] %vm203, 0.0
      %237 = vst.msk [vmem:[#allocation2 + $0x100] sm:$0x3] %vm206, 0.0
      %238 = vst.msk [vmem:[#allocation2 + $0x108] sm:$0xff] %vm203, 0.0
      %239 = vst.msk [vmem:[#allocation2 + $0x110] sm:$0xff] %vm203, 0.0
      %240 = vst.msk [vmem:[#allocation2 + $0x118] sm:$0x3] %vm206, 0.0
      %241 = vst.msk [vmem:[#allocation2 + $0x120] sm:$0xff] %vm203, 0.0
      %242 = vst.msk [vmem:[#allocation2 + $0x128] sm:$0xff] %vm203, 0.0
      %243 = vst.msk [vmem:[#allocation2 + $0x130] sm:$0x3] %vm206, 0.0
      %244 = vst.msk [vmem:[#allocation2 + $0x138] sm:$0xff] %vm203, 0.0
      %245 = vst.msk [vmem:[#allocation2 + $0x140] sm:$0xff] %vm203, 0.0
      %246 = vst.msk [vmem:[#allocation2 + $0x148] sm:$0x3] %vm206, 0.0
      %247 = vst.msk [vmem:[#allocation2 + $0x150] sm:$0xff] %vm203, 0.0
      %248 = vst.msk [vmem:[#allocation2 + $0x158] sm:$0xff] %vm203, 0.0
      %249 = vst.msk [vmem:[#allocation2 + $0x160] sm:$0x3] %vm206, 0.0
      %250 = vst.msk [vmem:[#allocation2 + $0x168] sm:$0xff] %vm203, 0.0
      %251 = vst.msk [vmem:[#allocation2 + $0x170] sm:$0xff] %vm203, 0.0
      %252 = vst.msk [vmem:[#allocation2 + $0x178] sm:$0x3] %vm206, 0.0
      %253 = vst.msk [vmem:[#allocation2 + $0x180] sm:$0xff] %vm203, 0.0
      %254 = vst.msk [vmem:[#allocation2 + $0x188] sm:$0xff] %vm203, 0.0
      %255 = vst.msk [vmem:[#allocation2 + $0x190] sm:$0x3] %vm206, 0.0
      %256 = vst.msk [vmem:[#allocation2 + $0x198] sm:$0xff] %vm203, 0.0
      %257 = vst.msk [vmem:[#allocation2 + $0x1a0] sm:$0xff] %vm203, 0.0
      %258 = vst.msk [vmem:[#allocation2 + $0x1a8] sm:$0x3] %vm206, 0.0
      %s259 = scalar_lea.vmem [#allocation2], 24
      %260 = vst.msk [vmem:[%s259 + $0x1] sm:$0xff] %vm203, %v171
      %261 = vst.msk [vmem:[%s259 + $0x9] sm:$0xff] %vm203, %v172
      %262 = vst.msk [vmem:[%s259 + $0x19] sm:$0xff] %vm203, %v173
      %263 = vst.msk [vmem:[%s259 + $0x21] sm:$0xff] %vm203, %v174
      %264 = vst.msk [vmem:[%s259 + $0x31] sm:$0xff] %vm203, %v175
      %265 = vst.msk [vmem:[%s259 + $0x39] sm:$0xff] %vm203, %v176
      %266 = vst.msk [vmem:[%s259 + $0x49] sm:$0xff] %vm203, %v177
      %267 = vst.msk [vmem:[%s259 + $0x51] sm:$0xff] %vm203, %v178
      %268 = vst.msk [vmem:[%s259 + $0x61] sm:$0xff] %vm203, %v179
      %269 = vst.msk [vmem:[%s259 + $0x69] sm:$0xff] %vm203, %v180
      %270 = vst.msk [vmem:[%s259 + $0x79] sm:$0xff] %vm203, %v181
      %271 = vst.msk [vmem:[%s259 + $0x81] sm:$0xff] %vm203, %v182
      %272 = vst.msk [vmem:[%s259 + $0x91] sm:$0xff] %vm203, %v183
      %273 = vst.msk [vmem:[%s259 + $0x99] sm:$0xff] %vm203, %v184
      %274 = vst.msk [vmem:[%s259 + $0xa9] sm:$0xff] %vm203, %v185
      %275 = vst.msk [vmem:[%s259 + $0xb1] sm:$0xff] %vm203, %v186
      %276 = vst.msk [vmem:[%s259 + $0xc1] sm:$0xff] %vm203, %v187
      %277 = vst.msk [vmem:[%s259 + $0xc9] sm:$0xff] %vm203, %v188
      %278 = vst.msk [vmem:[%s259 + $0xd9] sm:$0xff] %vm203, %v189
      %279 = vst.msk [vmem:[%s259 + $0xe1] sm:$0xff] %vm203, %v190
      %280 = vst.msk [vmem:[%s259 + $0xf1] sm:$0xff] %vm203, %v191
      %281 = vst.msk [vmem:[%s259 + $0xf9] sm:$0xff] %vm203, %v192
      %282 = vst.msk [vmem:[%s259 + $0x109] sm:$0xff] %vm203, %v193
      %283 = vst.msk [vmem:[%s259 + $0x111] sm:$0xff] %vm203, %v194
      %284 = vst.msk [vmem:[%s259 + $0x121] sm:$0xff] %vm203, %v195
      %285 = vst.msk [vmem:[%s259 + $0x129] sm:$0xff] %vm203, %v196
      %286 = vst.msk [vmem:[%s259 + $0x139] sm:$0xff] %vm203, %v197
      %287 = vst.msk [vmem:[%s259 + $0x141] sm:$0xff] %vm203, %v198
      %288 = vst.msk [vmem:[%s259 + $0x151] sm:$0xff] %vm203, %v199
      %289 = vst.msk [vmem:[%s259 + $0x159] sm:$0xff] %vm203, %v200
      %290 = vst.msk [vmem:[%s259 + $0x169] sm:$0xff] %vm203, %v201
      %291 = vst.msk [vmem:[%s259 + $0x171] sm:$0xff] %vm203, %v202
      %v292 = vld [vmem:[#allocation2] sm:$0xff]
      %v293 = vld [vmem:[#allocation2 + $0x8] sm:$0xff]
      %v294 = vld [vmem:[#allocation2 + $0x10] sm:$0x3]
      %v295 = vld [vmem:[#allocation2 + $0x18] sm:$0xff]
      %v296 = vld [vmem:[#allocation2 + $0x20] sm:$0xff]
      %v297 = vld [vmem:[#allocation2 + $0x28] sm:$0x3]
      %v298 = vld [vmem:[#allocation2 + $0x30] sm:$0xff]
      %v299 = vld [vmem:[#allocation2 + $0x38] sm:$0xff]
      %v300 = vld [vmem:[#allocation2 + $0x40] sm:$0x3]
      %v301 = vld [vmem:[#allocation2 + $0x48] sm:$0xff]
      %v302 = vld [vmem:[#allocation2 + $0x50] sm:$0xff]
      %v303 = vld [vmem:[#allocation2 + $0x58] sm:$0x3]
      %v304 = vld [vmem:[#allocation2 + $0x60] sm:$0xff]
      %v305 = vld [vmem:[#allocation2 + $0x68] sm:$0xff]
      %v306 = vld [vmem:[#allocation2 + $0x70] sm:$0x3]
      %v307 = vld [vmem:[#allocation2 + $0x78] sm:$0xff]
      %v308 = vld [vmem:[#allocation2 + $0x80] sm:$0xff]
      %v309 = vld [vmem:[#allocation2 + $0x88] sm:$0x3]
      %v310 = vld [vmem:[#allocation2 + $0x90] sm:$0xff]
      %v311 = vld [vmem:[#allocation2 + $0x98] sm:$0xff]
      %v312 = vld [vmem:[#allocation2 + $0xa0] sm:$0x3]
      %v313 = vld [vmem:[#allocation2 + $0xa8] sm:$0xff]
      %v314 = vld [vmem:[#allocation2 + $0xb0] sm:$0xff]
      %v315 = vld [vmem:[#allocation2 + $0xb8] sm:$0x3]
      %v316 = vld [vmem:[#allocation2 + $0xc0] sm:$0xff]
      %v317 = vld [vmem:[#allocation2 + $0xc8] sm:$0xff]
      %v318 = vld [vmem:[#allocation2 + $0xd0] sm:$0x3]
      %v319 = vld [vmem:[#allocation2 + $0xd8] sm:$0xff]
      %v320 = vld [vmem:[#allocation2 + $0xe0] sm:$0xff]
      %v321 = vld [vmem:[#allocation2 + $0xe8] sm:$0x3]
      %v322 = vld [vmem:[#allocation2 + $0xf0] sm:$0xff]
      %v323 = vld [vmem:[#allocation2 + $0xf8] sm:$0xff]
      %v324 = vld [vmem:[#allocation2 + $0x100] sm:$0x3]
      %v325 = vld [vmem:[#allocation2 + $0x108] sm:$0xff]
      %v326 = vld [vmem:[#allocation2 + $0x110] sm:$0xff]
      %v327 = vld [vmem:[#allocation2 + $0x118] sm:$0x3]
      %v328 = vld [vmem:[#allocation2 + $0x120] sm:$0xff]
      %v329 = vld [vmem:[#allocation2 + $0x128] sm:$0xff]
      %v330 = vld [vmem:[#allocation2 + $0x130] sm:$0x3]
      %v331 = vld [vmem:[#allocation2 + $0x138] sm:$0xff]
      %v332 = vld [vmem:[#allocation2 + $0x140] sm:$0xff]
      %v333 = vld [vmem:[#allocation2 + $0x148] sm:$0x3]
      %v334 = vld [vmem:[#allocation2 + $0x150] sm:$0xff]
      %v335 = vld [vmem:[#allocation2 + $0x158] sm:$0xff]
      %v336 = vld [vmem:[#allocation2 + $0x160] sm:$0x3]
      %v337 = vld [vmem:[#allocation2 + $0x168] sm:$0xff]
      %v338 = vld [vmem:[#allocation2 + $0x170] sm:$0xff]
      %v339 = vld [vmem:[#allocation2 + $0x178] sm:$0x3]
      %v340 = vld [vmem:[#allocation2 + $0x180] sm:$0xff]
      %v341 = vld [vmem:[#allocation2 + $0x188] sm:$0xff]
      %v342 = vld [vmem:[#allocation2 + $0x190] sm:$0x3]
      %v343 = vld [vmem:[#allocation2 + $0x198] sm:$0xff]
      %v344 = vld [vmem:[#allocation2 + $0x1a0] sm:$0xff]
      %v345 = vld [vmem:[#allocation2 + $0x1a8] sm:$0x3]
      %346 = vst.msk [vmem:[#allocation3] sm:$0xff] %vm203, %v292
      %347 = vst.msk [vmem:[#allocation3 + $0x8] sm:$0xff] %vm203, %v293
      %348 = vst.msk [vmem:[#allocation3 + $0x10] sm:$0xff] %vm203, %v295
      %349 = vst.msk [vmem:[#allocation3 + $0x18] sm:$0xff] %vm203, %v296
      %350 = vst.msk [vmem:[#allocation3 + $0x20] sm:$0xff] %vm203, %v298
      %351 = vst.msk [vmem:[#allocation3 + $0x28] sm:$0xff] %vm203, %v299
      %352 = vst.msk [vmem:[#allocation3 + $0x30] sm:$0xff] %vm203, %v301
      %353 = vst.msk [vmem:[#allocation3 + $0x38] sm:$0xff] %vm203, %v302
      %354 = vst.msk [vmem:[#allocation3 + $0x40] sm:$0xff] %vm203, %v304
      %355 = vst.msk [vmem:[#allocation3 + $0x48] sm:$0xff] %vm203, %v305
      %356 = vst.msk [vmem:[#allocation3 + $0x50] sm:$0xff] %vm203, %v307
      %357 = vst.msk [vmem:[#allocation3 + $0x58] sm:$0xff] %vm203, %v308
      %358 = vst.msk [vmem:[#allocation3 + $0x60] sm:$0xff] %vm203, %v310
      %359 = vst.msk [vmem:[#allocation3 + $0x68] sm:$0xff] %vm203, %v311
      %360 = vst.msk [vmem:[#allocation3 + $0x70] sm:$0xff] %vm203, %v313
      %361 = vst.msk [vmem:[#allocation3 + $0x78] sm:$0xff] %vm203, %v314
      %362 = vst.msk [vmem:[#allocation3 + $0x80] sm:$0xff] %vm203, %v316
      %363 = vst.msk [vmem:[#allocation3 + $0x88] sm:$0xff] %vm203, %v317
      %364 = vst.msk [vmem:[#allocation3 + $0x90] sm:$0xff] %vm203, %v319
      %365 = vst.msk [vmem:[#allocation3 + $0x98] sm:$0xff] %vm203, %v320
      %366 = vst.msk [vmem:[#allocation3 + $0xa0] sm:$0xff] %vm203, %v322
      %367 = vst.msk [vmem:[#allocation3 + $0xa8] sm:$0xff] %vm203, %v323
      %368 = vst.msk [vmem:[#allocation3 + $0xb0] sm:$0xff] %vm203, %v325
      %369 = vst.msk [vmem:[#allocation3 + $0xb8] sm:$0xff] %vm203, %v326
      %370 = vst.msk [vmem:[#allocation3 + $0xc0] sm:$0xff] %vm203, %v328
      %371 = vst.msk [vmem:[#allocation3 + $0xc8] sm:$0xff] %vm203, %v329
      %372 = vst.msk [vmem:[#allocation3 + $0xd0] sm:$0xff] %vm203, %v331
      %373 = vst.msk [vmem:[#allocation3 + $0xd8] sm:$0xff] %vm203, %v332
      %374 = vst.msk [vmem:[#allocation3 + $0xe0] sm:$0xff] %vm203, %v334
      %375 = vst.msk [vmem:[#allocation3 + $0xe8] sm:$0xff] %vm203, %v335
      %376 = vst.msk [vmem:[#allocation3 + $0xf0] sm:$0xff] %vm203, %v337
      %377 = vst.msk [vmem:[#allocation3 + $0xf8] sm:$0xff] %vm203, %v338
      %vm426 = vcmask 1046528
      %v427 = vrot.slane %v292, 1
      %v428 = vrot.slane %v293, 1
      %v429 = vsel %vm426, %v427, %v428
      %v430 = vrot.slane %v294, 1
      %v431 = vsel %vm426, %v428, %v430
      %v432 = vrot.slane %v295, 1
      %v433 = vrot.slane %v296, 1
      %v434 = vsel %vm426, %v432, %v433
      %v435 = vrot.slane %v297, 1
      %v436 = vsel %vm426, %v433, %v435
      %v437 = vrot.slane %v298, 1
      %v438 = vrot.slane %v299, 1
      %v439 = vsel %vm426, %v437, %v438
      %v440 = vrot.slane %v300, 1
      %v441 = vsel %vm426, %v438, %v440
      %v442 = vrot.slane %v301, 1
      %v443 = vrot.slane %v302, 1
      %v444 = vsel %vm426, %v442, %v443
      %v445 = vrot.slane %v303, 1
      %v446 = vsel %vm426, %v443, %v445
      %v447 = vrot.slane %v304, 1
      %v448 = vrot.slane %v305, 1
      %v449 = vsel %vm426, %v447, %v448
      %v450 = vrot.slane %v306, 1
      %v451 = vsel %vm426, %v448, %v450
      %v452 = vrot.slane %v307, 1
      %v453 = vrot.slane %v308, 1
      %v454 = vsel %vm426, %v452, %v453
      %v455 = vrot.slane %v309, 1
      %v456 = vsel %vm426, %v453, %v455
      %v457 = vrot.slane %v310, 1
      %v458 = vrot.slane %v311, 1
      %v459 = vsel %vm426, %v457, %v458
      %v460 = vrot.slane %v312, 1
      %v461 = vsel %vm426, %v458, %v460
      %v462 = vrot.slane %v313, 1
      %v463 = vrot.slane %v314, 1
      %v464 = vsel %vm426, %v462, %v463
      %v465 = vrot.slane %v315, 1
      %v466 = vsel %vm426, %v463, %v465
      %v467 = vrot.slane %v316, 1
      %v468 = vrot.slane %v317, 1
      %v469 = vsel %vm426, %v467, %v468
      %v470 = vrot.slane %v318, 1
      %v471 = vsel %vm426, %v468, %v470
      %v472 = vrot.slane %v319, 1
      %v473 = vrot.slane %v320, 1
      %v474 = vsel %vm426, %v472, %v473
      %v475 = vrot.slane %v321, 1
      %v476 = vsel %vm426, %v473, %v475
      %v477 = vrot.slane %v322, 1
      %v478 = vrot.slane %v323, 1
      %v479 = vsel %vm426, %v477, %v478
      %v480 = vrot.slane %v324, 1
      %v481 = vsel %vm426, %v478, %v480
      %v482 = vrot.slane %v325, 1
      %v483 = vrot.slane %v326, 1
      %v484 = vsel %vm426, %v482, %v483
      %v485 = vrot.slane %v327, 1
      %v486 = vsel %vm426, %v483, %v485
      %v487 = vrot.slane %v328, 1
      %v488 = vrot.slane %v329, 1
      %v489 = vsel %vm426, %v487, %v488
      %v490 = vrot.slane %v330, 1
      %v491 = vsel %vm426, %v488, %v490
      %v492 = vrot.slane %v331, 1
      %v493 = vrot.slane %v332, 1
      %v494 = vsel %vm426, %v492, %v493
      %v495 = vrot.slane %v333, 1
      %v496 = vsel %vm426, %v493, %v495
      %v497 = vrot.slane %v334, 1
      %v498 = vrot.slane %v335, 1
      %v499 = vsel %vm426, %v497, %v498
      %v500 = vrot.slane %v336, 1
      %v501 = vsel %vm426, %v498, %v500
      %v502 = vrot.slane %v337, 1
      %v503 = vrot.slane %v338, 1
      %v504 = vsel %vm426, %v502, %v503
      %v505 = vrot.slane %v339, 1
      %v506 = vsel %vm426, %v503, %v505
      %507 = vrot.lane.b32.xlu0 %v429, 4
      %v508 = vpop.permute.xlu0 %507
      %509 = vrot.lane.b32.xlu0 %v431, 4
      %v510 = vpop.permute.xlu0 %509
      %511 = vrot.lane.b32.xlu0 %v434, 4
      %v512 = vpop.permute.xlu0 %511
      %513 = vrot.lane.b32.xlu0 %v436, 4
      %v514 = vpop.permute.xlu0 %513
      %515 = vrot.lane.b32.xlu0 %v439, 4
      %v516 = vpop.permute.xlu0 %515
      %517 = vrot.lane.b32.xlu0 %v441, 4
      %v518 = vpop.permute.xlu0 %517
      %519 = vrot.lane.b32.xlu0 %v444, 4
      %v520 = vpop.permute.xlu0 %519
      %521 = vrot.lane.b32.xlu0 %v446, 4
      %v522 = vpop.permute.xlu0 %521
      %523 = vrot.lane.b32.xlu0 %v449, 4
      %v524 = vpop.permute.xlu0 %523
      %525 = vrot.lane.b32.xlu0 %v451, 4
      %v526 = vpop.permute.xlu0 %525
      %527 = vrot.lane.b32.xlu0 %v454, 4
      %v528 = vpop.permute.xlu0 %527
      %529 = vrot.lane.b32.xlu0 %v456, 4
      %v530 = vpop.permute.xlu0 %529
      %531 = vrot.lane.b32.xlu0 %v459, 4
      %v532 = vpop.permute.xlu0 %531
      %533 = vrot.lane.b32.xlu0 %v461, 4
      %v534 = vpop.permute.xlu0 %533
      %535 = vrot.lane.b32.xlu0 %v464, 4
      %v536 = vpop.permute.xlu0 %535
      %537 = vrot.lane.b32.xlu0 %v466, 4
      %v538 = vpop.permute.xlu0 %537
      %539 = vrot.lane.b32.xlu0 %v469, 4
      %v540 = vpop.permute.xlu0 %539
      %541 = vrot.lane.b32.xlu0 %v471, 4
      %v542 = vpop.permute.xlu0 %541
      %543 = vrot.lane.b32.xlu0 %v474, 4
      %v544 = vpop.permute.xlu0 %543
      %545 = vrot.lane.b32.xlu0 %v476, 4
      %v546 = vpop.permute.xlu0 %545
      %547 = vrot.lane.b32.xlu0 %v479, 4
      %v548 = vpop.permute.xlu0 %547
      %549 = vrot.lane.b32.xlu0 %v481, 4
      %v550 = vpop.permute.xlu0 %549
      %551 = vrot.lane.b32.xlu0 %v484, 4
      %v552 = vpop.permute.xlu0 %551
      %553 = vrot.lane.b32.xlu0 %v486, 4
      %v554 = vpop.permute.xlu0 %553
      %555 = vrot.lane.b32.xlu0 %v489, 4
      %v556 = vpop.permute.xlu0 %555
      %557 = vrot.lane.b32.xlu0 %v491, 4
      %v558 = vpop.permute.xlu0 %557
      %559 = vrot.lane.b32.xlu0 %v494, 4
      %v560 = vpop.permute.xlu0 %559
      %561 = vrot.lane.b32.xlu0 %v496, 4
      %v562 = vpop.permute.xlu0 %561
      %563 = vrot.lane.b32.xlu0 %v499, 4
      %v564 = vpop.permute.xlu0 %563
      %565 = vrot.lane.b32.xlu0 %v501, 4
      %v566 = vpop.permute.xlu0 %565
      %567 = vrot.lane.b32.xlu0 %v504, 4
      %v568 = vpop.permute.xlu0 %567
      %569 = vrot.lane.b32.xlu0 %v506, 4
      %v570 = vpop.permute.xlu0 %569
      %vm603 = vcmask 64544
      %604 = vst.msk [vmem:[#allocation3] sm:$0xff] %vm603, %v508
      %605 = vst.msk [vmem:[#allocation3 + $0x8] sm:$0xff] %vm603, %v510
      %606 = vst.msk [vmem:[#allocation3 + $0x10] sm:$0xff] %vm603, %v512
      %607 = vst.msk [vmem:[#allocation3 + $0x18] sm:$0xff] %vm603, %v514
      %608 = vst.msk [vmem:[#allocation3 + $0x20] sm:$0xff] %vm603, %v516
      %609 = vst.msk [vmem:[#allocation3 + $0x28] sm:$0xff] %vm603, %v518
      %610 = vst.msk [vmem:[#allocation3 + $0x30] sm:$0xff] %vm603, %v520
      %611 = vst.msk [vmem:[#allocation3 + $0x38] sm:$0xff] %vm603, %v522
      %612 = vst.msk [vmem:[#allocation3 + $0x40] sm:$0xff] %vm603, %v524
      %613 = vst.msk [vmem:[#allocation3 + $0x48] sm:$0xff] %vm603, %v526
      %614 = vst.msk [vmem:[#allocation3 + $0x50] sm:$0xff] %vm603, %v528
      %615 = vst.msk [vmem:[#allocation3 + $0x58] sm:$0xff] %vm603, %v530
      %616 = vst.msk [vmem:[#allocation3 + $0x60] sm:$0xff] %vm603, %v532
      %617 = vst.msk [vmem:[#allocation3 + $0x68] sm:$0xff] %vm603, %v534
      %618 = vst.msk [vmem:[#allocation3 + $0x70] sm:$0xff] %vm603, %v536
      %619 = vst.msk [vmem:[#allocation3 + $0x78] sm:$0xff] %vm603, %v538
      %620 = vst.msk [vmem:[#allocation3 + $0x80] sm:$0xff] %vm603, %v540
      %621 = vst.msk [vmem:[#allocation3 + $0x88] sm:$0xff] %vm603, %v542
      %622 = vst.msk [vmem:[#allocation3 + $0x90] sm:$0xff] %vm603, %v544
      %623 = vst.msk [vmem:[#allocation3 + $0x98] sm:$0xff] %vm603, %v546
      %624 = vst.msk [vmem:[#allocation3 + $0xa0] sm:$0xff] %vm603, %v548
      %625 = vst.msk [vmem:[#allocation3 + $0xa8] sm:$0xff] %vm603, %v550
      %626 = vst.msk [vmem:[#allocation3 + $0xb0] sm:$0xff] %vm603, %v552
      %627 = vst.msk [vmem:[#allocation3 + $0xb8] sm:$0xff] %vm603, %v554
      %628 = vst.msk [vmem:[#allocation3 + $0xc0] sm:$0xff] %vm603, %v556
      %629 = vst.msk [vmem:[#allocation3 + $0xc8] sm:$0xff] %vm603, %v558
      %630 = vst.msk [vmem:[#allocation3 + $0xd0] sm:$0xff] %vm603, %v560
      %631 = vst.msk [vmem:[#allocation3 + $0xd8] sm:$0xff] %vm603, %v562
      %632 = vst.msk [vmem:[#allocation3 + $0xe0] sm:$0xff] %vm603, %v564
      %633 = vst.msk [vmem:[#allocation3 + $0xe8] sm:$0xff] %vm603, %v566
      %634 = vst.msk [vmem:[#allocation3 + $0xf0] sm:$0xff] %vm603, %v568
      %635 = vst.msk [vmem:[#allocation3 + $0xf8] sm:$0xff] %vm603, %v570
      %vm636 = vcmask 1045504
      %v637 = vrot.slane %v292, 2
      %v638 = vrot.slane %v293, 2
      %v639 = vsel %vm636, %v637, %v638
      %v640 = vrot.slane %v294, 2
      %v641 = vsel %vm636, %v638, %v640
      %v642 = vrot.slane %v295, 2
      %v643 = vrot.slane %v296, 2
      %v644 = vsel %vm636, %v642, %v643
      %v645 = vrot.slane %v297, 2
      %v646 = vsel %vm636, %v643, %v645
      %v647 = vrot.slane %v298, 2
      %v648 = vrot.slane %v299, 2
      %v649 = vsel %vm636, %v647, %v648
      %v650 = vrot.slane %v300, 2
      %v651 = vsel %vm636, %v648, %v650
      %v652 = vrot.slane %v301, 2
      %v653 = vrot.slane %v302, 2
      %v654 = vsel %vm636, %v652, %v653
      %v655 = vrot.slane %v303, 2
      %v656 = vsel %vm636, %v653, %v655
      %v657 = vrot.slane %v304, 2
      %v658 = vrot.slane %v305, 2
      %v659 = vsel %vm636, %v657, %v658
      %v660 = vrot.slane %v306, 2
      %v661 = vsel %vm636, %v658, %v660
      %v662 = vrot.slane %v307, 2
      %v663 = vrot.slane %v308, 2
      %v664 = vsel %vm636, %v662, %v663
      %v665 = vrot.slane %v309, 2
      %v666 = vsel %vm636, %v663, %v665
      %v667 = vrot.slane %v310, 2
      %v668 = vrot.slane %v311, 2
      %v669 = vsel %vm636, %v667, %v668
      %v670 = vrot.slane %v312, 2
      %v671 = vsel %vm636, %v668, %v670
      %v672 = vrot.slane %v313, 2
      %v673 = vrot.slane %v314, 2
      %v674 = vsel %vm636, %v672, %v673
      %v675 = vrot.slane %v315, 2
      %v676 = vsel %vm636, %v673, %v675
      %v677 = vrot.slane %v316, 2
      %v678 = vrot.slane %v317, 2
      %v679 = vsel %vm636, %v677, %v678
      %v680 = vrot.slane %v318, 2
      %v681 = vsel %vm636, %v678, %v680
      %v682 = vrot.slane %v319, 2
      %v683 = vrot.slane %v320, 2
      %v684 = vsel %vm636, %v682, %v683
      %v685 = vrot.slane %v321, 2
      %v686 = vsel %vm636, %v683, %v685
      %v687 = vrot.slane %v322, 2
      %v688 = vrot.slane %v323, 2
      %v689 = vsel %vm636, %v687, %v688
      %v690 = vrot.slane %v324, 2
      %v691 = vsel %vm636, %v688, %v690
      %v692 = vrot.slane %v325, 2
      %v693 = vrot.slane %v326, 2
      %v694 = vsel %vm636, %v692, %v693
      %v695 = vrot.slane %v327, 2
      %v696 = vsel %vm636, %v693, %v695
      %v697 = vrot.slane %v328, 2
      %v698 = vrot.slane %v329, 2
      %v699 = vsel %vm636, %v697, %v698
      %v700 = vrot.slane %v330, 2
      %v701 = vsel %vm636, %v698, %v700
      %v702 = vrot.slane %v331, 2
      %v703 = vrot.slane %v332, 2
      %v704 = vsel %vm636, %v702, %v703
      %v705 = vrot.slane %v333, 2
      %v706 = vsel %vm636, %v703, %v705
      %v707 = vrot.slane %v334, 2
      %v708 = vrot.slane %v335, 2
      %v709 = vsel %vm636, %v707, %v708
      %v710 = vrot.slane %v336, 2
      %v711 = vsel %vm636, %v708, %v710
      %v712 = vrot.slane %v337, 2
      %v713 = vrot.slane %v338, 2
      %v714 = vsel %vm636, %v712, %v713
      %v715 = vrot.slane %v339, 2
      %v716 = vsel %vm636, %v713, %v715
      %717 = vrot.lane.b32.xlu0 %v639, 8
      %v718 = vpop.permute.xlu0 %717
      %719 = vrot.lane.b32.xlu0 %v641, 8
      %v720 = vpop.permute.xlu0 %719
      %721 = vrot.lane.b32.xlu0 %v644, 8
      %v722 = vpop.permute.xlu0 %721
      %723 = vrot.lane.b32.xlu0 %v646, 8
      %v724 = vpop.permute.xlu0 %723
      %725 = vrot.lane.b32.xlu0 %v649, 8
      %v726 = vpop.permute.xlu0 %725
      %727 = vrot.lane.b32.xlu0 %v651, 8
      %v728 = vpop.permute.xlu0 %727
      %729 = vrot.lane.b32.xlu0 %v654, 8
      %v730 = vpop.permute.xlu0 %729
      %731 = vrot.lane.b32.xlu0 %v656, 8
      %v732 = vpop.permute.xlu0 %731
      %733 = vrot.lane.b32.xlu0 %v659, 8
      %v734 = vpop.permute.xlu0 %733
      %735 = vrot.lane.b32.xlu0 %v661, 8
      %v736 = vpop.permute.xlu0 %735
      %737 = vrot.lane.b32.xlu0 %v664, 8
      %v738 = vpop.permute.xlu0 %737
      %739 = vrot.lane.b32.xlu0 %v666, 8
      %v740 = vpop.permute.xlu0 %739
      %741 = vrot.lane.b32.xlu0 %v669, 8
      %v742 = vpop.permute.xlu0 %741
      %743 = vrot.lane.b32.xlu0 %v671, 8
      %v744 = vpop.permute.xlu0 %743
      %745 = vrot.lane.b32.xlu0 %v674, 8
      %v746 = vpop.permute.xlu0 %745
      %747 = vrot.lane.b32.xlu0 %v676, 8
      %v748 = vpop.permute.xlu0 %747
      %749 = vrot.lane.b32.xlu0 %v679, 8
      %v750 = vpop.permute.xlu0 %749
      %751 = vrot.lane.b32.xlu0 %v681, 8
      %v752 = vpop.permute.xlu0 %751
      %753 = vrot.lane.b32.xlu0 %v684, 8
      %v754 = vpop.permute.xlu0 %753
      %755 = vrot.lane.b32.xlu0 %v686, 8
      %v756 = vpop.permute.xlu0 %755
      %757 = vrot.lane.b32.xlu0 %v689, 8
      %v758 = vpop.permute.xlu0 %757
      %759 = vrot.lane.b32.xlu0 %v691, 8
      %v760 = vpop.permute.xlu0 %759
      %761 = vrot.lane.b32.xlu0 %v694, 8
      %v762 = vpop.permute.xlu0 %761
      %763 = vrot.lane.b32.xlu0 %v696, 8
      %v764 = vpop.permute.xlu0 %763
      %765 = vrot.lane.b32.xlu0 %v699, 8
      %v766 = vpop.permute.xlu0 %765
      %767 = vrot.lane.b32.xlu0 %v701, 8
      %v768 = vpop.permute.xlu0 %767
      %769 = vrot.lane.b32.xlu0 %v704, 8
      %v770 = vpop.permute.xlu0 %769
      %771 = vrot.lane.b32.xlu0 %v706, 8
      %v772 = vpop.permute.xlu0 %771
      %773 = vrot.lane.b32.xlu0 %v709, 8
      %v774 = vpop.permute.xlu0 %773
      %775 = vrot.lane.b32.xlu0 %v711, 8
      %v776 = vpop.permute.xlu0 %775
      %777 = vrot.lane.b32.xlu0 %v714, 8
      %v778 = vpop.permute.xlu0 %777
      %779 = vrot.lane.b32.xlu0 %v716, 8
      %v780 = vpop.permute.xlu0 %779
      %vm813 = vcmask 97344
      %814 = vst.msk [vmem:[#allocation3] sm:$0xff] %vm813, %v718
      %815 = vst.msk [vmem:[#allocation3 + $0x8] sm:$0xff] %vm813, %v720
      %816 = vst.msk [vmem:[#allocation3 + $0x10] sm:$0xff] %vm813, %v722
      %817 = vst.msk [vmem:[#allocation3 + $0x18] sm:$0xff] %vm813, %v724
      %818 = vst.msk [vmem:[#allocation3 + $0x20] sm:$0xff] %vm813, %v726
      %819 = vst.msk [vmem:[#allocation3 + $0x28] sm:$0xff] %vm813, %v728
      %820 = vst.msk [vmem:[#allocation3 + $0x30] sm:$0xff] %vm813, %v730
      %821 = vst.msk [vmem:[#allocation3 + $0x38] sm:$0xff] %vm813, %v732
      %822 = vst.msk [vmem:[#allocation3 + $0x40] sm:$0xff] %vm813, %v734
      %823 = vst.msk [vmem:[#allocation3 + $0x48] sm:$0xff] %vm813, %v736
      %824 = vst.msk [vmem:[#allocation3 + $0x50] sm:$0xff] %vm813, %v738
      %825 = vst.msk [vmem:[#allocation3 + $0x58] sm:$0xff] %vm813, %v740
      %826 = vst.msk [vmem:[#allocation3 + $0x60] sm:$0xff] %vm813, %v742
      %827 = vst.msk [vmem:[#allocation3 + $0x68] sm:$0xff] %vm813, %v744
      %828 = vst.msk [vmem:[#allocation3 + $0x70] sm:$0xff] %vm813, %v746
      %829 = vst.msk [vmem:[#allocation3 + $0x78] sm:$0xff] %vm813, %v748
      %830 = vst.msk [vmem:[#allocation3 + $0x80] sm:$0xff] %vm813, %v750
      %831 = vst.msk [vmem:[#allocation3 + $0x88] sm:$0xff] %vm813, %v752
      %832 = vst.msk [vmem:[#allocation3 + $0x90] sm:$0xff] %vm813, %v754
      %833 = vst.msk [vmem:[#allocation3 + $0x98] sm:$0xff] %vm813, %v756
      %834 = vst.msk [vmem:[#allocation3 + $0xa0] sm:$0xff] %vm813, %v758
      %835 = vst.msk [vmem:[#allocation3 + $0xa8] sm:$0xff] %vm813, %v760
      %836 = vst.msk [vmem:[#allocation3 + $0xb0] sm:$0xff] %vm813, %v762
      %837 = vst.msk [vmem:[#allocation3 + $0xb8] sm:$0xff] %vm813, %v764
      %838 = vst.msk [vmem:[#allocation3 + $0xc0] sm:$0xff] %vm813, %v766
      %839 = vst.msk [vmem:[#allocation3 + $0xc8] sm:$0xff] %vm813, %v768
      %840 = vst.msk [vmem:[#allocation3 + $0xd0] sm:$0xff] %vm813, %v770
      %841 = vst.msk [vmem:[#allocation3 + $0xd8] sm:$0xff] %vm813, %v772
      %842 = vst.msk [vmem:[#allocation3 + $0xe0] sm:$0xff] %vm813, %v774
      %843 = vst.msk [vmem:[#allocation3 + $0xe8] sm:$0xff] %vm813, %v776
      %844 = vst.msk [vmem:[#allocation3 + $0xf0] sm:$0xff] %vm813, %v778
      %845 = vst.msk [vmem:[#allocation3 + $0xf8] sm:$0xff] %vm813, %v780
      %848 = vrot.lane.b32.xlu0 %v295, 12
      %v849 = vpop.permute.xlu0 %848
      %850 = vrot.lane.b32.xlu0 %v296, 12
      %v851 = vpop.permute.xlu0 %850
      %852 = vrot.lane.b32.xlu0 %v298, 12
      %v853 = vpop.permute.xlu0 %852
      %854 = vrot.lane.b32.xlu0 %v299, 12
      %v855 = vpop.permute.xlu0 %854
      %856 = vrot.lane.b32.xlu0 %v301, 12
      %v857 = vpop.permute.xlu0 %856
      %858 = vrot.lane.b32.xlu0 %v302, 12
      %v859 = vpop.permute.xlu0 %858
      %860 = vrot.lane.b32.xlu0 %v304, 12
      %v861 = vpop.permute.xlu0 %860
      %862 = vrot.lane.b32.xlu0 %v305, 12
      %v863 = vpop.permute.xlu0 %862
      %864 = vrot.lane.b32.xlu0 %v307, 12
      %v865 = vpop.permute.xlu0 %864
      %866 = vrot.lane.b32.xlu0 %v308, 12
      %v867 = vpop.permute.xlu0 %866
      %868 = vrot.lane.b32.xlu0 %v310, 12
      %v869 = vpop.permute.xlu0 %868
      %870 = vrot.lane.b32.xlu0 %v311, 12
      %v871 = vpop.permute.xlu0 %870
      %872 = vrot.lane.b32.xlu0 %v313, 12
      %v873 = vpop.permute.xlu0 %872
      %874 = vrot.lane.b32.xlu0 %v314, 12
      %v875 = vpop.permute.xlu0 %874
      %876 = vrot.lane.b32.xlu0 %v316, 12
      %v877 = vpop.permute.xlu0 %876
      %878 = vrot.lane.b32.xlu0 %v317, 12
      %v879 = vpop.permute.xlu0 %878
      %880 = vrot.lane.b32.xlu0 %v319, 12
      %v881 = vpop.permute.xlu0 %880
      %882 = vrot.lane.b32.xlu0 %v320, 12
      %v883 = vpop.permute.xlu0 %882
      %884 = vrot.lane.b32.xlu0 %v322, 12
      %v885 = vpop.permute.xlu0 %884
      %886 = vrot.lane.b32.xlu0 %v323, 12
      %v887 = vpop.permute.xlu0 %886
      %888 = vrot.lane.b32.xlu0 %v325, 12
      %v889 = vpop.permute.xlu0 %888
      %890 = vrot.lane.b32.xlu0 %v326, 12
      %v891 = vpop.permute.xlu0 %890
      %892 = vrot.lane.b32.xlu0 %v328, 12
      %v893 = vpop.permute.xlu0 %892
      %894 = vrot.lane.b32.xlu0 %v329, 12
      %v895 = vpop.permute.xlu0 %894
      %896 = vrot.lane.b32.xlu0 %v331, 12
      %v897 = vpop.permute.xlu0 %896
      %898 = vrot.lane.b32.xlu0 %v332, 12
      %v899 = vpop.permute.xlu0 %898
      %900 = vrot.lane.b32.xlu0 %v334, 12
      %v901 = vpop.permute.xlu0 %900
      %902 = vrot.lane.b32.xlu0 %v335, 12
      %v903 = vpop.permute.xlu0 %902
      %904 = vrot.lane.b32.xlu0 %v337, 12
      %v905 = vpop.permute.xlu0 %904
      %906 = vrot.lane.b32.xlu0 %v338, 12
      %v907 = vpop.permute.xlu0 %906
      %908 = vrot.lane.b32.xlu0 %v340, 12
      %v909 = vpop.permute.xlu0 %908
      %910 = vrot.lane.b32.xlu0 %v341, 12
      %v911 = vpop.permute.xlu0 %910
      %vm944 = vcmask 130144
      %945 = vst.msk [vmem:[#allocation3] sm:$0xff] %vm944, %v849
      %946 = vst.msk [vmem:[#allocation3 + $0x8] sm:$0xff] %vm944, %v851
      %947 = vst.msk [vmem:[#allocation3 + $0x10] sm:$0xff] %vm944, %v853
      %948 = vst.msk [vmem:[#allocation3 + $0x18] sm:$0xff] %vm944, %v855
      %949 = vst.msk [vmem:[#allocation3 + $0x20] sm:$0xff] %vm944, %v857
      %950 = vst.msk [vmem:[#allocation3 + $0x28] sm:$0xff] %vm944, %v859
      %951 = vst.msk [vmem:[#allocation3 + $0x30] sm:$0xff] %vm944, %v861
      %952 = vst.msk [vmem:[#allocation3 + $0x38] sm:$0xff] %vm944, %v863
      %953 = vst.msk [vmem:[#allocation3 + $0x40] sm:$0xff] %vm944, %v865
      %954 = vst.msk [vmem:[#allocation3 + $0x48] sm:$0xff] %vm944, %v867
      %955 = vst.msk [vmem:[#allocation3 + $0x50] sm:$0xff] %vm944, %v869
      %956 = vst.msk [vmem:[#allocation3 + $0x58] sm:$0xff] %vm944, %v871
      %957 = vst.msk [vmem:[#allocation3 + $0x60] sm:$0xff] %vm944, %v873
      %958 = vst.msk [vmem:[#allocation3 + $0x68] sm:$0xff] %vm944, %v875
      %959 = vst.msk [vmem:[#allocation3 + $0x70] sm:$0xff] %vm944, %v877
      %960 = vst.msk [vmem:[#allocation3 + $0x78] sm:$0xff] %vm944, %v879
      %961 = vst.msk [vmem:[#allocation3 + $0x80] sm:$0xff] %vm944, %v881
      %962 = vst.msk [vmem:[#allocation3 + $0x88] sm:$0xff] %vm944, %v883
      %963 = vst.msk [vmem:[#allocation3 + $0x90] sm:$0xff] %vm944, %v885
      %964 = vst.msk [vmem:[#allocation3 + $0x98] sm:$0xff] %vm944, %v887
      %965 = vst.msk [vmem:[#allocation3 + $0xa0] sm:$0xff] %vm944, %v889
      %966 = vst.msk [vmem:[#allocation3 + $0xa8] sm:$0xff] %vm944, %v891
      %967 = vst.msk [vmem:[#allocation3 + $0xb0] sm:$0xff] %vm944, %v893
      %968 = vst.msk [vmem:[#allocation3 + $0xb8] sm:$0xff] %vm944, %v895
      %969 = vst.msk [vmem:[#allocation3 + $0xc0] sm:$0xff] %vm944, %v897
      %970 = vst.msk [vmem:[#allocation3 + $0xc8] sm:$0xff] %vm944, %v899
      %971 = vst.msk [vmem:[#allocation3 + $0xd0] sm:$0xff] %vm944, %v901
      %972 = vst.msk [vmem:[#allocation3 + $0xd8] sm:$0xff] %vm944, %v903
      %973 = vst.msk [vmem:[#allocation3 + $0xe0] sm:$0xff] %vm944, %v905
      %974 = vst.msk [vmem:[#allocation3 + $0xe8] sm:$0xff] %vm944, %v907
      %975 = vst.msk [vmem:[#allocation3 + $0xf0] sm:$0xff] %vm944, %v909
      %976 = vst.msk [vmem:[#allocation3 + $0xf8] sm:$0xff] %vm944, %v911
      %v978 = vrot.slane %v340, 1
      %v979 = vrot.slane %v341, 1
      %v980 = vsel %vm426, %v978, %v979
      %v981 = vrot.slane %v342, 1
      %v982 = vsel %vm426, %v979, %v981
      %983 = vrot.lane.b32.xlu0 %v434, 16
      %v984 = vpop.permute.xlu0 %983
      %985 = vrot.lane.b32.xlu0 %v436, 16
      %v986 = vpop.permute.xlu0 %985
      %987 = vrot.lane.b32.xlu0 %v439, 16
      %v988 = vpop.permute.xlu0 %987
      %989 = vrot.lane.b32.xlu0 %v441, 16
      %v990 = vpop.permute.xlu0 %989
      %991 = vrot.lane.b32.xlu0 %v444, 16
      %v992 = vpop.permute.xlu0 %991
      %993 = vrot.lane.b32.xlu0 %v446, 16
      %v994 = vpop.permute.xlu0 %993
      %995 = vrot.lane.b32.xlu0 %v449, 16
      %v996 = vpop.permute.xlu0 %995
      %997 = vrot.lane.b32.xlu0 %v451, 16
      %v998 = vpop.permute.xlu0 %997
      %999 = vrot.lane.b32.xlu0 %v454, 16
      %v1000 = vpop.permute.xlu0 %999
      %1001 = vrot.lane.b32.xlu0 %v456, 16
      %v1002 = vpop.permute.xlu0 %1001
      %1003 = vrot.lane.b32.xlu0 %v459, 16
      %v1004 = vpop.permute.xlu0 %1003
      %1005 = vrot.lane.b32.xlu0 %v461, 16
      %v1006 = vpop.permute.xlu0 %1005
      %1007 = vrot.lane.b32.xlu0 %v464, 16
      %v1008 = vpop.permute.xlu0 %1007
      %1009 = vrot.lane.b32.xlu0 %v466, 16
      %v1010 = vpop.permute.xlu0 %1009
      %1011 = vrot.lane.b32.xlu0 %v469, 16
      %v1012 = vpop.permute.xlu0 %1011
      %1013 = vrot.lane.b32.xlu0 %v471, 16
      %v1014 = vpop.permute.xlu0 %1013
      %1015 = vrot.lane.b32.xlu0 %v474, 16
      %v1016 = vpop.permute.xlu0 %1015
      %1017 = vrot.lane.b32.xlu0 %v476, 16
      %v1018 = vpop.permute.xlu0 %1017
      %1019 = vrot.lane.b32.xlu0 %v479, 16
      %v1020 = vpop.permute.xlu0 %1019
      %1021 = vrot.lane.b32.xlu0 %v481, 16
      %v1022 = vpop.permute.xlu0 %1021
      %1023 = vrot.lane.b32.xlu0 %v484, 16
      %v1024 = vpop.permute.xlu0 %1023
      %1025 = vrot.lane.b32.xlu0 %v486, 16
      %v1026 = vpop.permute.xlu0 %1025
      %1027 = vrot.lane.b32.xlu0 %v489, 16
      %v1028 = vpop.permute.xlu0 %1027
      %1029 = vrot.lane.b32.xlu0 %v491, 16
      %v1030 = vpop.permute.xlu0 %1029
      %1031 = vrot.lane.b32.xlu0 %v494, 16
      %v1032 = vpop.permute.xlu0 %1031
      %1033 = vrot.lane.b32.xlu0 %v496, 16
      %v1034 = vpop.permute.xlu0 %1033
      %1035 = vrot.lane.b32.xlu0 %v499, 16
      %v1036 = vpop.permute.xlu0 %1035
      %1037 = vrot.lane.b32.xlu0 %v501, 16
      %v1038 = vpop.permute.xlu0 %1037
      %1039 = vrot.lane.b32.xlu0 %v504, 16
      %v1040 = vpop.permute.xlu0 %1039
      %1041 = vrot.lane.b32.xlu0 %v506, 16
      %v1042 = vpop.permute.xlu0 %1041
      %1043 = vrot.lane.b32.xlu0 %v980, 16
      %v1044 = vpop.permute.xlu0 %1043
      %1045 = vrot.lane.b32.xlu0 %v982, 16
      %v1046 = vpop.permute.xlu0 %1045
      %vm1079 = vcmask 162944
      %1080 = vst.msk [vmem:[#allocation3] sm:$0xff] %vm1079, %v984
      %1081 = vst.msk [vmem:[#allocation3 + $0x8] sm:$0xff] %vm1079, %v986
      %1082 = vst.msk [vmem:[#allocation3 + $0x10] sm:$0xff] %vm1079, %v988
      %1083 = vst.msk [vmem:[#allocation3 + $0x18] sm:$0xff] %vm1079, %v990
      %1084 = vst.msk [vmem:[#allocation3 + $0x20] sm:$0xff] %vm1079, %v992
      %1085 = vst.msk [vmem:[#allocation3 + $0x28] sm:$0xff] %vm1079, %v994
      %1086 = vst.msk [vmem:[#allocation3 + $0x30] sm:$0xff] %vm1079, %v996
      %1087 = vst.msk [vmem:[#allocation3 + $0x38] sm:$0xff] %vm1079, %v998
      %1088 = vst.msk [vmem:[#allocation3 + $0x40] sm:$0xff] %vm1079, %v1000
      %1089 = vst.msk [vmem:[#allocation3 + $0x48] sm:$0xff] %vm1079, %v1002
      %1090 = vst.msk [vmem:[#allocation3 + $0x50] sm:$0xff] %vm1079, %v1004
      %1091 = vst.msk [vmem:[#allocation3 + $0x58] sm:$0xff] %vm1079, %v1006
      %1092 = vst.msk [vmem:[#allocation3 + $0x60] sm:$0xff] %vm1079, %v1008
      %1093 = vst.msk [vmem:[#allocation3 + $0x68] sm:$0xff] %vm1079, %v1010
      %1094 = vst.msk [vmem:[#allocation3 + $0x70] sm:$0xff] %vm1079, %v1012
      %1095 = vst.msk [vmem:[#allocation3 + $0x78] sm:$0xff] %vm1079, %v1014
      %1096 = vst.msk [vmem:[#allocation3 + $0x80] sm:$0xff] %vm1079, %v1016
      %1097 = vst.msk [vmem:[#allocation3 + $0x88] sm:$0xff] %vm1079, %v1018
      %1098 = vst.msk [vmem:[#allocation3 + $0x90] sm:$0xff] %vm1079, %v1020
      %1099 = vst.msk [vmem:[#allocation3 + $0x98] sm:$0xff] %vm1079, %v1022
      %1100 = vst.msk [vmem:[#allocation3 + $0xa0] sm:$0xff] %vm1079, %v1024
      %1101 = vst.msk [vmem:[#allocation3 + $0xa8] sm:$0xff] %vm1079, %v1026
      %1102 = vst.msk [vmem:[#allocation3 + $0xb0] sm:$0xff] %vm1079, %v1028
      %1103 = vst.msk [vmem:[#allocation3 + $0xb8] sm:$0xff] %vm1079, %v1030
      %1104 = vst.msk [vmem:[#allocation3 + $0xc0] sm:$0xff] %vm1079, %v1032
      %1105 = vst.msk [vmem:[#allocation3 + $0xc8] sm:$0xff] %vm1079, %v1034
      %1106 = vst.msk [vmem:[#allocation3 + $0xd0] sm:$0xff] %vm1079, %v1036
      %1107 = vst.msk [vmem:[#allocation3 + $0xd8] sm:$0xff] %vm1079, %v1038
      %1108 = vst.msk [vmem:[#allocation3 + $0xe0] sm:$0xff] %vm1079, %v1040
      %1109 = vst.msk [vmem:[#allocation3 + $0xe8] sm:$0xff] %vm1079, %v1042
      %1110 = vst.msk [vmem:[#allocation3 + $0xf0] sm:$0xff] %vm1079, %v1044
      %1111 = vst.msk [vmem:[#allocation3 + $0xf8] sm:$0xff] %vm1079, %v1046
      %v1112 = vrot.slane %v340, 2
      %v1113 = vrot.slane %v341, 2
      %v1114 = vsel %vm636, %v1112, %v1113
      %v1115 = vrot.slane %v342, 2
      %v1116 = vsel %vm636, %v1113, %v1115
      %1117 = vrot.lane.b32.xlu0 %v644, 20
      %v1118 = vpop.permute.xlu0 %1117
      %1119 = vrot.lane.b32.xlu0 %v646, 20
      %v1120 = vpop.permute.xlu0 %1119
      %1121 = vrot.lane.b32.xlu0 %v649, 20
      %v1122 = vpop.permute.xlu0 %1121
      %1123 = vrot.lane.b32.xlu0 %v651, 20
      %v1124 = vpop.permute.xlu0 %1123
      %1125 = vrot.lane.b32.xlu0 %v654, 20
      %v1126 = vpop.permute.xlu0 %1125
      %1127 = vrot.lane.b32.xlu0 %v656, 20
      %v1128 = vpop.permute.xlu0 %1127
      %1129 = vrot.lane.b32.xlu0 %v659, 20
      %v1130 = vpop.permute.xlu0 %1129
      %1131 = vrot.lane.b32.xlu0 %v661, 20
      %v1132 = vpop.permute.xlu0 %1131
      %1133 = vrot.lane.b32.xlu0 %v664, 20
      %v1134 = vpop.permute.xlu0 %1133
      %1135 = vrot.lane.b32.xlu0 %v666, 20
      %v1136 = vpop.permute.xlu0 %1135
      %1137 = vrot.lane.b32.xlu0 %v669, 20
      %v1138 = vpop.permute.xlu0 %1137
      %1139 = vrot.lane.b32.xlu0 %v671, 20
      %v1140 = vpop.permute.xlu0 %1139
      %1141 = vrot.lane.b32.xlu0 %v674, 20
      %v1142 = vpop.permute.xlu0 %1141
      %1143 = vrot.lane.b32.xlu0 %v676, 20
      %v1144 = vpop.permute.xlu0 %1143
      %1145 = vrot.lane.b32.xlu0 %v679, 20
      %v1146 = vpop.permute.xlu0 %1145
      %1147 = vrot.lane.b32.xlu0 %v681, 20
      %v1148 = vpop.permute.xlu0 %1147
      %1149 = vrot.lane.b32.xlu0 %v684, 20
      %v1150 = vpop.permute.xlu0 %1149
      %1151 = vrot.lane.b32.xlu0 %v686, 20
      %v1152 = vpop.permute.xlu0 %1151
      %1153 = vrot.lane.b32.xlu0 %v689, 20
      %v1154 = vpop.permute.xlu0 %1153
      %1155 = vrot.lane.b32.xlu0 %v691, 20
      %v1156 = vpop.permute.xlu0 %1155
      %1157 = vrot.lane.b32.xlu0 %v694, 20
      %v1158 = vpop.permute.xlu0 %1157
      %1159 = vrot.lane.b32.xlu0 %v696, 20
      %v1160 = vpop.permute.xlu0 %1159
      %1161 = vrot.lane.b32.xlu0 %v699, 20
      %v1162 = vpop.permute.xlu0 %1161
      %1163 = vrot.lane.b32.xlu0 %v701, 20
      %v1164 = vpop.permute.xlu0 %1163
      %1165 = vrot.lane.b32.xlu0 %v704, 20
      %v1166 = vpop.permute.xlu0 %1165
      %1167 = vrot.lane.b32.xlu0 %v706, 20
      %v1168 = vpop.permute.xlu0 %1167
      %1169 = vrot.lane.b32.xlu0 %v709, 20
      %v1170 = vpop.permute.xlu0 %1169
      %1171 = vrot.lane.b32.xlu0 %v711, 20
      %v1172 = vpop.permute.xlu0 %1171
      %1173 = vrot.lane.b32.xlu0 %v714, 20
      %v1174 = vpop.permute.xlu0 %1173
      %1175 = vrot.lane.b32.xlu0 %v716, 20
      %v1176 = vpop.permute.xlu0 %1175
      %1177 = vrot.lane.b32.xlu0 %v1114, 20
      %v1178 = vpop.permute.xlu0 %1177
      %1179 = vrot.lane.b32.xlu0 %v1116, 20
      %v1180 = vpop.permute.xlu0 %1179
      %vm1213 = vcmask 195744
      %1214 = vst.msk [vmem:[#allocation3] sm:$0xff] %vm1213, %v1118
      %1215 = vst.msk [vmem:[#allocation3 + $0x8] sm:$0xff] %vm1213, %v1120
      %1216 = vst.msk [vmem:[#allocation3 + $0x10] sm:$0xff] %vm1213, %v1122
      %1217 = vst.msk [vmem:[#allocation3 + $0x18] sm:$0xff] %vm1213, %v1124
      %1218 = vst.msk [vmem:[#allocation3 + $0x20] sm:$0xff] %vm1213, %v1126
      %1219 = vst.msk [vmem:[#allocation3 + $0x28] sm:$0xff] %vm1213, %v1128
      %1220 = vst.msk [vmem:[#allocation3 + $0x30] sm:$0xff] %vm1213, %v1130
      %1221 = vst.msk [vmem:[#allocation3 + $0x38] sm:$0xff] %vm1213, %v1132
      %1222 = vst.msk [vmem:[#allocation3 + $0x40] sm:$0xff] %vm1213, %v1134
      %1223 = vst.msk [vmem:[#allocation3 + $0x48] sm:$0xff] %vm1213, %v1136
      %1224 = vst.msk [vmem:[#allocation3 + $0x50] sm:$0xff] %vm1213, %v1138
      %1225 = vst.msk [vmem:[#allocation3 + $0x58] sm:$0xff] %vm1213, %v1140
      %1226 = vst.msk [vmem:[#allocation3 + $0x60] sm:$0xff] %vm1213, %v1142
      %1227 = vst.msk [vmem:[#allocation3 + $0x68] sm:$0xff] %vm1213, %v1144
      %1228 = vst.msk [vmem:[#allocation3 + $0x70] sm:$0xff] %vm1213, %v1146
      %1229 = vst.msk [vmem:[#allocation3 + $0x78] sm:$0xff] %vm1213, %v1148
      %1230 = vst.msk [vmem:[#allocation3 + $0x80] sm:$0xff] %vm1213, %v1150
      %1231 = vst.msk [vmem:[#allocation3 + $0x88] sm:$0xff] %vm1213, %v1152
      %1232 = vst.msk [vmem:[#allocation3 + $0x90] sm:$0xff] %vm1213, %v1154
      %1233 = vst.msk [vmem:[#allocation3 + $0x98] sm:$0xff] %vm1213, %v1156
      %1234 = vst.msk [vmem:[#allocation3 + $0xa0] sm:$0xff] %vm1213, %v1158
      %1235 = vst.msk [vmem:[#allocation3 + $0xa8] sm:$0xff] %vm1213, %v1160
      %1236 = vst.msk [vmem:[#allocation3 + $0xb0] sm:$0xff] %vm1213, %v1162
      %1237 = vst.msk [vmem:[#allocation3 + $0xb8] sm:$0xff] %vm1213, %v1164
      %1238 = vst.msk [vmem:[#allocation3 + $0xc0] sm:$0xff] %vm1213, %v1166
      %1239 = vst.msk [vmem:[#allocation3 + $0xc8] sm:$0xff] %vm1213, %v1168
      %1240 = vst.msk [vmem:[#allocation3 + $0xd0] sm:$0xff] %vm1213, %v1170
      %1241 = vst.msk [vmem:[#allocation3 + $0xd8] sm:$0xff] %vm1213, %v1172
      %1242 = vst.msk [vmem:[#allocation3 + $0xe0] sm:$0xff] %vm1213, %v1174
      %1243 = vst.msk [vmem:[#allocation3 + $0xe8] sm:$0xff] %vm1213, %v1176
      %1244 = vst.msk [vmem:[#allocation3 + $0xf0] sm:$0xff] %vm1213, %v1178
      %1245 = vst.msk [vmem:[#allocation3 + $0xf8] sm:$0xff] %vm1213, %v1180
      %1248 = vrot.lane.b32.xlu0 %v298, 24
      %v1249 = vpop.permute.xlu0 %1248
      %1250 = vrot.lane.b32.xlu0 %v299, 24
      %v1251 = vpop.permute.xlu0 %1250
      %1252 = vrot.lane.b32.xlu0 %v301, 24
      %v1253 = vpop.permute.xlu0 %1252
      %1254 = vrot.lane.b32.xlu0 %v302, 24
      %v1255 = vpop.permute.xlu0 %1254
      %1256 = vrot.lane.b32.xlu0 %v304, 24
      %v1257 = vpop.permute.xlu0 %1256
      %1258 = vrot.lane.b32.xlu0 %v305, 24
      %v1259 = vpop.permute.xlu0 %1258
      %1260 = vrot.lane.b32.xlu0 %v307, 24
      %v1261 = vpop.permute.xlu0 %1260
      %1262 = vrot.lane.b32.xlu0 %v308, 24
      %v1263 = vpop.permute.xlu0 %1262
      %1264 = vrot.lane.b32.xlu0 %v310, 24
      %v1265 = vpop.permute.xlu0 %1264
      %1266 = vrot.lane.b32.xlu0 %v311, 24
      %v1267 = vpop.permute.xlu0 %1266
      %1268 = vrot.lane.b32.xlu0 %v313, 24
      %v1269 = vpop.permute.xlu0 %1268
      %1270 = vrot.lane.b32.xlu0 %v314, 24
      %v1271 = vpop.permute.xlu0 %1270
      %1272 = vrot.lane.b32.xlu0 %v316, 24
      %v1273 = vpop.permute.xlu0 %1272
      %1274 = vrot.lane.b32.xlu0 %v317, 24
      %v1275 = vpop.permute.xlu0 %1274
      %1276 = vrot.lane.b32.xlu0 %v319, 24
      %v1277 = vpop.permute.xlu0 %1276
      %1278 = vrot.lane.b32.xlu0 %v320, 24
      %v1279 = vpop.permute.xlu0 %1278
      %1280 = vrot.lane.b32.xlu0 %v322, 24
      %v1281 = vpop.permute.xlu0 %1280
      %1282 = vrot.lane.b32.xlu0 %v323, 24
      %v1283 = vpop.permute.xlu0 %1282
      %1284 = vrot.lane.b32.xlu0 %v325, 24
      %v1285 = vpop.permute.xlu0 %1284
      %1286 = vrot.lane.b32.xlu0 %v326, 24
      %v1287 = vpop.permute.xlu0 %1286
      %1288 = vrot.lane.b32.xlu0 %v328, 24
      %v1289 = vpop.permute.xlu0 %1288
      %1290 = vrot.lane.b32.xlu0 %v329, 24
      %v1291 = vpop.permute.xlu0 %1290
      %1292 = vrot.lane.b32.xlu0 %v331, 24
      %v1293 = vpop.permute.xlu0 %1292
      %1294 = vrot.lane.b32.xlu0 %v332, 24
      %v1295 = vpop.permute.xlu0 %1294
      %1296 = vrot.lane.b32.xlu0 %v334, 24
      %v1297 = vpop.permute.xlu0 %1296
      %1298 = vrot.lane.b32.xlu0 %v335, 24
      %v1299 = vpop.permute.xlu0 %1298
      %1300 = vrot.lane.b32.xlu0 %v337, 24
      %v1301 = vpop.permute.xlu0 %1300
      %1302 = vrot.lane.b32.xlu0 %v338, 24
      %v1303 = vpop.permute.xlu0 %1302
      %1304 = vrot.lane.b32.xlu0 %v340, 24
      %v1305 = vpop.permute.xlu0 %1304
      %1306 = vrot.lane.b32.xlu0 %v341, 24
      %v1307 = vpop.permute.xlu0 %1306
      %1308 = vrot.lane.b32.xlu0 %v343, 24
      %v1309 = vpop.permute.xlu0 %1308
      %1310 = vrot.lane.b32.xlu0 %v344, 24
      %v1311 = vpop.permute.xlu0 %1310
      %vm1344 = vcmask 228544
      %1345 = vst.msk [vmem:[#allocation3] sm:$0xff] %vm1344, %v1249
      %1346 = vst.msk [vmem:[#allocation3 + $0x8] sm:$0xff] %vm1344, %v1251
      %1347 = vst.msk [vmem:[#allocation3 + $0x10] sm:$0xff] %vm1344, %v1253
      %1348 = vst.msk [vmem:[#allocation3 + $0x18] sm:$0xff] %vm1344, %v1255
      %1349 = vst.msk [vmem:[#allocation3 + $0x20] sm:$0xff] %vm1344, %v1257
      %1350 = vst.msk [vmem:[#allocation3 + $0x28] sm:$0xff] %vm1344, %v1259
      %1351 = vst.msk [vmem:[#allocation3 + $0x30] sm:$0xff] %vm1344, %v1261
      %1352 = vst.msk [vmem:[#allocation3 + $0x38] sm:$0xff] %vm1344, %v1263
      %1353 = vst.msk [vmem:[#allocation3 + $0x40] sm:$0xff] %vm1344, %v1265
      %1354 = vst.msk [vmem:[#allocation3 + $0x48] sm:$0xff] %vm1344, %v1267
      %1355 = vst.msk [vmem:[#allocation3 + $0x50] sm:$0xff] %vm1344, %v1269
      %1356 = vst.msk [vmem:[#allocation3 + $0x58] sm:$0xff] %vm1344, %v1271
      %1357 = vst.msk [vmem:[#allocation3 + $0x60] sm:$0xff] %vm1344, %v1273
      %1358 = vst.msk [vmem:[#allocation3 + $0x68] sm:$0xff] %vm1344, %v1275
      %1359 = vst.msk [vmem:[#allocation3 + $0x70] sm:$0xff] %vm1344, %v1277
      %1360 = vst.msk [vmem:[#allocation3 + $0x78] sm:$0xff] %vm1344, %v1279
      %1361 = vst.msk [vmem:[#allocation3 + $0x80] sm:$0xff] %vm1344, %v1281
      %1362 = vst.msk [vmem:[#allocation3 + $0x88] sm:$0xff] %vm1344, %v1283
      %1363 = vst.msk [vmem:[#allocation3 + $0x90] sm:$0xff] %vm1344, %v1285
      %1364 = vst.msk [vmem:[#allocation3 + $0x98] sm:$0xff] %vm1344, %v1287
      %1365 = vst.msk [vmem:[#allocation3 + $0xa0] sm:$0xff] %vm1344, %v1289
      %1366 = vst.msk [vmem:[#allocation3 + $0xa8] sm:$0xff] %vm1344, %v1291
      %1367 = vst.msk [vmem:[#allocation3 + $0xb0] sm:$0xff] %vm1344, %v1293
      %1368 = vst.msk [vmem:[#allocation3 + $0xb8] sm:$0xff] %vm1344, %v1295
      %1369 = vst.msk [vmem:[#allocation3 + $0xc0] sm:$0xff] %vm1344, %v1297
      %1370 = vst.msk [vmem:[#allocation3 + $0xc8] sm:$0xff] %vm1344, %v1299
      %1371 = vst.msk [vmem:[#allocation3 + $0xd0] sm:$0xff] %vm1344, %v1301
      %1372 = vst.msk [vmem:[#allocation3 + $0xd8] sm:$0xff] %vm1344, %v1303
      %1373 = vst.msk [vmem:[#allocation3 + $0xe0] sm:$0xff] %vm1344, %v1305
      %1374 = vst.msk [vmem:[#allocation3 + $0xe8] sm:$0xff] %vm1344, %v1307
      %1375 = vst.msk [vmem:[#allocation3 + $0xf0] sm:$0xff] %vm1344, %v1309
      %1376 = vst.msk [vmem:[#allocation3 + $0xf8] sm:$0xff] %vm1344, %v1311
      %v1378 = vrot.slane %v343, 1
      %v1379 = vrot.slane %v344, 1
      %v1380 = vsel %vm426, %v1378, %v1379
      %v1381 = vrot.slane %v345, 1
      %v1382 = vsel %vm426, %v1379, %v1381
      %1383 = vrot.lane.b32.xlu0 %v439, 28
      %v1384 = vpop.permute.xlu0 %1383
      %1385 = vrot.lane.b32.xlu0 %v441, 28
      %v1386 = vpop.permute.xlu0 %1385
      %1387 = vrot.lane.b32.xlu0 %v444, 28
      %v1388 = vpop.permute.xlu0 %1387
      %1389 = vrot.lane.b32.xlu0 %v446, 28
      %v1390 = vpop.permute.xlu0 %1389
      %1391 = vrot.lane.b32.xlu0 %v449, 28
      %v1392 = vpop.permute.xlu0 %1391
      %1393 = vrot.lane.b32.xlu0 %v451, 28
      %v1394 = vpop.permute.xlu0 %1393
      %1395 = vrot.lane.b32.xlu0 %v454, 28
      %v1396 = vpop.permute.xlu0 %1395
      %1397 = vrot.lane.b32.xlu0 %v456, 28
      %v1398 = vpop.permute.xlu0 %1397
      %1399 = vrot.lane.b32.xlu0 %v459, 28
      %v1400 = vpop.permute.xlu0 %1399
      %1401 = vrot.lane.b32.xlu0 %v461, 28
      %v1402 = vpop.permute.xlu0 %1401
      %1403 = vrot.lane.b32.xlu0 %v464, 28
      %v1404 = vpop.permute.xlu0 %1403
      %1405 = vrot.lane.b32.xlu0 %v466, 28
      %v1406 = vpop.permute.xlu0 %1405
      %1407 = vrot.lane.b32.xlu0 %v469, 28
      %v1408 = vpop.permute.xlu0 %1407
      %1409 = vrot.lane.b32.xlu0 %v471, 28
      %v1410 = vpop.permute.xlu0 %1409
      %1411 = vrot.lane.b32.xlu0 %v474, 28
      %v1412 = vpop.permute.xlu0 %1411
      %1413 = vrot.lane.b32.xlu0 %v476, 28
      %v1414 = vpop.permute.xlu0 %1413
      %1415 = vrot.lane.b32.xlu0 %v479, 28
      %v1416 = vpop.permute.xlu0 %1415
      %1417 = vrot.lane.b32.xlu0 %v481, 28
      %v1418 = vpop.permute.xlu0 %1417
      %1419 = vrot.lane.b32.xlu0 %v484, 28
      %v1420 = vpop.permute.xlu0 %1419
      %1421 = vrot.lane.b32.xlu0 %v486, 28
      %v1422 = vpop.permute.xlu0 %1421
      %1423 = vrot.lane.b32.xlu0 %v489, 28
      %v1424 = vpop.permute.xlu0 %1423
      %1425 = vrot.lane.b32.xlu0 %v491, 28
      %v1426 = vpop.permute.xlu0 %1425
      %1427 = vrot.lane.b32.xlu0 %v494, 28
      %v1428 = vpop.permute.xlu0 %1427
      %1429 = vrot.lane.b32.xlu0 %v496, 28
      %v1430 = vpop.permute.xlu0 %1429
      %1431 = vrot.lane.b32.xlu0 %v499, 28
      %v1432 = vpop.permute.xlu0 %1431
      %1433 = vrot.lane.b32.xlu0 %v501, 28
      %v1434 = vpop.permute.xlu0 %1433
      %1435 = vrot.lane.b32.xlu0 %v504, 28
      %v1436 = vpop.permute.xlu0 %1435
      %1437 = vrot.lane.b32.xlu0 %v506, 28
      %v1438 = vpop.permute.xlu0 %1437
      %1439 = vrot.lane.b32.xlu0 %v980, 28
      %v1440 = vpop.permute.xlu0 %1439
      %1441 = vrot.lane.b32.xlu0 %v982, 28
      %v1442 = vpop.permute.xlu0 %1441
      %1443 = vrot.lane.b32.xlu0 %v1380, 28
      %v1444 = vpop.permute.xlu0 %1443
      %1445 = vrot.lane.b32.xlu0 %v1382, 28
      %v1446 = vpop.permute.xlu0 %1445
      %vm1479 = vcmask 261344
      %1480 = vst.msk [vmem:[#allocation3] sm:$0xff] %vm1479, %v1384
      %1481 = vst.msk [vmem:[#allocation3 + $0x8] sm:$0xff] %vm1479, %v1386
      %1482 = vst.msk [vmem:[#allocation3 + $0x10] sm:$0xff] %vm1479, %v1388
      %1483 = vst.msk [vmem:[#allocation3 + $0x18] sm:$0xff] %vm1479, %v1390
      %1484 = vst.msk [vmem:[#allocation3 + $0x20] sm:$0xff] %vm1479, %v1392
      %1485 = vst.msk [vmem:[#allocation3 + $0x28] sm:$0xff] %vm1479, %v1394
      %1486 = vst.msk [vmem:[#allocation3 + $0x30] sm:$0xff] %vm1479, %v1396
      %1487 = vst.msk [vmem:[#allocation3 + $0x38] sm:$0xff] %vm1479, %v1398
      %1488 = vst.msk [vmem:[#allocation3 + $0x40] sm:$0xff] %vm1479, %v1400
      %1489 = vst.msk [vmem:[#allocation3 + $0x48] sm:$0xff] %vm1479, %v1402
      %1490 = vst.msk [vmem:[#allocation3 + $0x50] sm:$0xff] %vm1479, %v1404
      %1491 = vst.msk [vmem:[#allocation3 + $0x58] sm:$0xff] %vm1479, %v1406
      %1492 = vst.msk [vmem:[#allocation3 + $0x60] sm:$0xff] %vm1479, %v1408
      %1493 = vst.msk [vmem:[#allocation3 + $0x68] sm:$0xff] %vm1479, %v1410
      %1494 = vst.msk [vmem:[#allocation3 + $0x70] sm:$0xff] %vm1479, %v1412
      %1495 = vst.msk [vmem:[#allocation3 + $0x78] sm:$0xff] %vm1479, %v1414
      %1496 = vst.msk [vmem:[#allocation3 + $0x80] sm:$0xff] %vm1479, %v1416
      %1497 = vst.msk [vmem:[#allocation3 + $0x88] sm:$0xff] %vm1479, %v1418
      %1498 = vst.msk [vmem:[#allocation3 + $0x90] sm:$0xff] %vm1479, %v1420
      %1499 = vst.msk [vmem:[#allocation3 + $0x98] sm:$0xff] %vm1479, %v1422
      %1500 = vst.msk [vmem:[#allocation3 + $0xa0] sm:$0xff] %vm1479, %v1424
      %1501 = vst.msk [vmem:[#allocation3 + $0xa8] sm:$0xff] %vm1479, %v1426
      %1502 = vst.msk [vmem:[#allocation3 + $0xb0] sm:$0xff] %vm1479, %v1428
      %1503 = vst.msk [vmem:[#allocation3 + $0xb8] sm:$0xff] %vm1479, %v1430
      %1504 = vst.msk [vmem:[#allocation3 + $0xc0] sm:$0xff] %vm1479, %v1432
      %1505 = vst.msk [vmem:[#allocation3 + $0xc8] sm:$0xff] %vm1479, %v1434
      %1506 = vst.msk [vmem:[#allocation3 + $0xd0] sm:$0xff] %vm1479, %v1436
      %1507 = vst.msk [vmem:[#allocation3 + $0xd8] sm:$0xff] %vm1479, %v1438
      %1508 = vst.msk [vmem:[#allocation3 + $0xe0] sm:$0xff] %vm1479, %v1440
      %1509 = vst.msk [vmem:[#allocation3 + $0xe8] sm:$0xff] %vm1479, %v1442
      %1510 = vst.msk [vmem:[#allocation3 + $0xf0] sm:$0xff] %vm1479, %v1444
      %1511 = vst.msk [vmem:[#allocation3 + $0xf8] sm:$0xff] %vm1479, %v1446
      %v1512 = vrot.slane %v343, 2
      %v1513 = vrot.slane %v344, 2
      %v1514 = vsel %vm636, %v1512, %v1513
      %v1515 = vrot.slane %v345, 2
      %v1516 = vsel %vm636, %v1513, %v1515
      %1517 = vrot.lane.b32.xlu0 %v649, 32
      %v1518 = vpop.permute.xlu0 %1517
      %1519 = vrot.lane.b32.xlu0 %v651, 32
      %v1520 = vpop.permute.xlu0 %1519
      %1521 = vrot.lane.b32.xlu0 %v654, 32
      %v1522 = vpop.permute.xlu0 %1521
      %1523 = vrot.lane.b32.xlu0 %v656, 32
      %v1524 = vpop.permute.xlu0 %1523
      %1525 = vrot.lane.b32.xlu0 %v659, 32
      %v1526 = vpop.permute.xlu0 %1525
      %1527 = vrot.lane.b32.xlu0 %v661, 32
      %v1528 = vpop.permute.xlu0 %1527
      %1529 = vrot.lane.b32.xlu0 %v664, 32
      %v1530 = vpop.permute.xlu0 %1529
      %1531 = vrot.lane.b32.xlu0 %v666, 32
      %v1532 = vpop.permute.xlu0 %1531
      %1533 = vrot.lane.b32.xlu0 %v669, 32
      %v1534 = vpop.permute.xlu0 %1533
      %1535 = vrot.lane.b32.xlu0 %v671, 32
      %v1536 = vpop.permute.xlu0 %1535
      %1537 = vrot.lane.b32.xlu0 %v674, 32
      %v1538 = vpop.permute.xlu0 %1537
      %1539 = vrot.lane.b32.xlu0 %v676, 32
      %v1540 = vpop.permute.xlu0 %1539
      %1541 = vrot.lane.b32.xlu0 %v679, 32
      %v1542 = vpop.permute.xlu0 %1541
      %1543 = vrot.lane.b32.xlu0 %v681, 32
      %v1544 = vpop.permute.xlu0 %1543
      %1545 = vrot.lane.b32.xlu0 %v684, 32
      %v1546 = vpop.permute.xlu0 %1545
      %1547 = vrot.lane.b32.xlu0 %v686, 32
      %v1548 = vpop.permute.xlu0 %1547
      %1549 = vrot.lane.b32.xlu0 %v689, 32
      %v1550 = vpop.permute.xlu0 %1549
      %1551 = vrot.lane.b32.xlu0 %v691, 32
      %v1552 = vpop.permute.xlu0 %1551
      %1553 = vrot.lane.b32.xlu0 %v694, 32
      %v1554 = vpop.permute.xlu0 %1553
      %1555 = vrot.lane.b32.xlu0 %v696, 32
      %v1556 = vpop.permute.xlu0 %1555
      %1557 = vrot.lane.b32.xlu0 %v699, 32
      %v1558 = vpop.permute.xlu0 %1557
      %1559 = vrot.lane.b32.xlu0 %v701, 32
      %v1560 = vpop.permute.xlu0 %1559
      %1561 = vrot.lane.b32.xlu0 %v704, 32
      %v1562 = vpop.permute.xlu0 %1561
      %1563 = vrot.lane.b32.xlu0 %v706, 32
      %v1564 = vpop.permute.xlu0 %1563
      %1565 = vrot.lane.b32.xlu0 %v709, 32
      %v1566 = vpop.permute.xlu0 %1565
      %1567 = vrot.lane.b32.xlu0 %v711, 32
      %v1568 = vpop.permute.xlu0 %1567
      %1569 = vrot.lane.b32.xlu0 %v714, 32
      %v1570 = vpop.permute.xlu0 %1569
      %1571 = vrot.lane.b32.xlu0 %v716, 32
      %v1572 = vpop.permute.xlu0 %1571
      %1573 = vrot.lane.b32.xlu0 %v1114, 32
      %v1574 = vpop.permute.xlu0 %1573
      %1575 = vrot.lane.b32.xlu0 %v1116, 32
      %v1576 = vpop.permute.xlu0 %1575
      %1577 = vrot.lane.b32.xlu0 %v1514, 32
      %v1578 = vpop.permute.xlu0 %1577
      %1579 = vrot.lane.b32.xlu0 %v1516, 32
      %v1580 = vpop.permute.xlu0 %1579
      %vm1613 = vcmask 294144
      %1614 = vst.msk [vmem:[#allocation3] sm:$0xff] %vm1613, %v1518
      %1615 = vst.msk [vmem:[#allocation3 + $0x8] sm:$0xff] %vm1613, %v1520
      %1616 = vst.msk [vmem:[#allocation3 + $0x10] sm:$0xff] %vm1613, %v1522
      %1617 = vst.msk [vmem:[#allocation3 + $0x18] sm:$0xff] %vm1613, %v1524
      %1618 = vst.msk [vmem:[#allocation3 + $0x20] sm:$0xff] %vm1613, %v1526
      %1619 = vst.msk [vmem:[#allocation3 + $0x28] sm:$0xff] %vm1613, %v1528
      %1620 = vst.msk [vmem:[#allocation3 + $0x30] sm:$0xff] %vm1613, %v1530
      %1621 = vst.msk [vmem:[#allocation3 + $0x38] sm:$0xff] %vm1613, %v1532
      %1622 = vst.msk [vmem:[#allocation3 + $0x40] sm:$0xff] %vm1613, %v1534
      %1623 = vst.msk [vmem:[#allocation3 + $0x48] sm:$0xff] %vm1613, %v1536
      %1624 = vst.msk [vmem:[#allocation3 + $0x50] sm:$0xff] %vm1613, %v1538
      %1625 = vst.msk [vmem:[#allocation3 + $0x58] sm:$0xff] %vm1613, %v1540
      %1626 = vst.msk [vmem:[#allocation3 + $0x60] sm:$0xff] %vm1613, %v1542
      %1627 = vst.msk [vmem:[#allocation3 + $0x68] sm:$0xff] %vm1613, %v1544
      %1628 = vst.msk [vmem:[#allocation3 + $0x70] sm:$0xff] %vm1613, %v1546
      %1629 = vst.msk [vmem:[#allocation3 + $0x78] sm:$0xff] %vm1613, %v1548
      %1630 = vst.msk [vmem:[#allocation3 + $0x80] sm:$0xff] %vm1613, %v1550
      %1631 = vst.msk [vmem:[#allocation3 + $0x88] sm:$0xff] %vm1613, %v1552
      %1632 = vst.msk [vmem:[#allocation3 + $0x90] sm:$0xff] %vm1613, %v1554
      %1633 = vst.msk [vmem:[#allocation3 + $0x98] sm:$0xff] %vm1613, %v1556
      %1634 = vst.msk [vmem:[#allocation3 + $0xa0] sm:$0xff] %vm1613, %v1558
      %1635 = vst.msk [vmem:[#allocation3 + $0xa8] sm:$0xff] %vm1613, %v1560
      %1636 = vst.msk [vmem:[#allocation3 + $0xb0] sm:$0xff] %vm1613, %v1562
      %1637 = vst.msk [vmem:[#allocation3 + $0xb8] sm:$0xff] %vm1613, %v1564
      %1638 = vst.msk [vmem:[#allocation3 + $0xc0] sm:$0xff] %vm1613, %v1566
      %1639 = vst.msk [vmem:[#allocation3 + $0xc8] sm:$0xff] %vm1613, %v1568
      %1640 = vst.msk [vmem:[#allocation3 + $0xd0] sm:$0xff] %vm1613, %v1570
      %1641 = vst.msk [vmem:[#allocation3 + $0xd8] sm:$0xff] %vm1613, %v1572
      %1642 = vst.msk [vmem:[#allocation3 + $0xe0] sm:$0xff] %vm1613, %v1574
      %1643 = vst.msk [vmem:[#allocation3 + $0xe8] sm:$0xff] %vm1613, %v1576
      %1644 = vst.msk [vmem:[#allocation3 + $0xf0] sm:$0xff] %vm1613, %v1578
      %1645 = vst.msk [vmem:[#allocation3 + $0xf8] sm:$0xff] %vm1613, %v1580
      %v1646 = vld [vmem:[#allocation3] sm:$0xff]
      %v1647 = vld [vmem:[#allocation3 + $0x8] sm:$0xff]
      %v1648 = vld [vmem:[#allocation3 + $0x10] sm:$0xff]
      %v1649 = vld [vmem:[#allocation3 + $0x18] sm:$0xff]
      %v1650 = vld [vmem:[#allocation3 + $0x20] sm:$0xff]
      %v1651 = vld [vmem:[#allocation3 + $0x28] sm:$0xff]
      %v1652 = vld [vmem:[#allocation3 + $0x30] sm:$0xff]
      %v1653 = vld [vmem:[#allocation3 + $0x38] sm:$0xff]
      %v1654 = vld [vmem:[#allocation3 + $0x40] sm:$0xff]
      %v1655 = vld [vmem:[#allocation3 + $0x48] sm:$0xff]
      %v1656 = vld [vmem:[#allocation3 + $0x50] sm:$0xff]
      %v1657 = vld [vmem:[#allocation3 + $0x58] sm:$0xff]
      %v1658 = vld [vmem:[#allocation3 + $0x60] sm:$0xff]
      %v1659 = vld [vmem:[#allocation3 + $0x68] sm:$0xff]
      %v1660 = vld [vmem:[#allocation3 + $0x70] sm:$0xff]
      %v1661 = vld [vmem:[#allocation3 + $0x78] sm:$0xff]
      %v1662 = vld [vmem:[#allocation3 + $0x80] sm:$0xff]
      %v1663 = vld [vmem:[#allocation3 + $0x88] sm:$0xff]
      %v1664 = vld [vmem:[#allocation3 + $0x90] sm:$0xff]
      %v1665 = vld [vmem:[#allocation3 + $0x98] sm:$0xff]
      %v1666 = vld [vmem:[#allocation3 + $0xa0] sm:$0xff]
      %v1667 = vld [vmem:[#allocation3 + $0xa8] sm:$0xff]
      %v1668 = vld [vmem:[#allocation3 + $0xb0] sm:$0xff]
      %v1669 = vld [vmem:[#allocation3 + $0xb8] sm:$0xff]
      %v1670 = vld [vmem:[#allocation3 + $0xc0] sm:$0xff]
      %v1671 = vld [vmem:[#allocation3 + $0xc8] sm:$0xff]
      %v1672 = vld [vmem:[#allocation3 + $0xd0] sm:$0xff]
      %v1673 = vld [vmem:[#allocation3 + $0xd8] sm:$0xff]
      %v1674 = vld [vmem:[#allocation3 + $0xe0] sm:$0xff]
      %v1675 = vld [vmem:[#allocation3 + $0xe8] sm:$0xff]
      %v1676 = vld [vmem:[#allocation3 + $0xf0] sm:$0xff]
      %v1677 = vld [vmem:[#allocation3 + $0xf8] sm:$0xff]
      %v1678 = vld [vmem:[%s1] sm:$0xff]
      %v1679 = vld [vmem:[%s1 + $0x8] sm:$0xff]
      %v1680 = vld [vmem:[%s1 + $0x10] sm:$0xff]
      %v1681 = vld [vmem:[%s1 + $0x18] sm:$0xff]
      %v1682 = vld [vmem:[%s1 + $0x20] sm:$0xf]
      %vm1683 = vcmask 293888
      %v1685 = vsel %vm1683, %v1646, 0
      %v1688 = vsel %vm1683, %v1647, 0
      %v1691 = vsel %vm1683, %v1648, 0
      %v1694 = vsel %vm1683, %v1649, 0
      %v1697 = vsel %vm1683, %v1650, 0
      %v1700 = vsel %vm1683, %v1651, 0
      %v1703 = vsel %vm1683, %v1652, 0
      %v1706 = vsel %vm1683, %v1653, 0
      %v1709 = vsel %vm1683, %v1654, 0
      %v1712 = vsel %vm1683, %v1655, 0
      %v1715 = vsel %vm1683, %v1656, 0
      %v1718 = vsel %vm1683, %v1657, 0
      %v1721 = vsel %vm1683, %v1658, 0
      %v1724 = vsel %vm1683, %v1659, 0
      %v1727 = vsel %vm1683, %v1660, 0
      %v1730 = vsel %vm1683, %v1661, 0
      %v1733 = vsel %vm1683, %v1662, 0
      %v1736 = vsel %vm1683, %v1663, 0
      %v1739 = vsel %vm1683, %v1664, 0
      %v1742 = vsel %vm1683, %v1665, 0
      %v1745 = vsel %vm1683, %v1666, 0
      %v1748 = vsel %vm1683, %v1667, 0
      %v1751 = vsel %vm1683, %v1668, 0
      %v1754 = vsel %vm1683, %v1669, 0
      %v1757 = vsel %vm1683, %v1670, 0
      %v1760 = vsel %vm1683, %v1671, 0
      %v1763 = vsel %vm1683, %v1672, 0
      %v1766 = vsel %vm1683, %v1673, 0
      %v1769 = vsel %vm1683, %v1674, 0
      %v1772 = vsel %vm1683, %v1675, 0
      %v1775 = vsel %vm1683, %v1676, 0
      %v1778 = vsel %vm1683, %v1677, 0
      %vm1780 = vcmask 1043456
      %v1782 = vsel %vm1780, %v1682, 0
      %1784 = vmatprep.subr.mxu0 0.0
      %1785 = vmatpush1.msra.mxu0 %v1678
      %1786 = vmatprep.subr.mxu0 0.0
      %1787 = vmatpush1.msra.mxu0 %v1679
      %1788 = vmatprep.subr.mxu0 0.0
      %1789 = vmatpush1.msra.mxu0 %v1680
      %1790 = vmatprep.subr.mxu0 0.0
      %1791 = vmatpush1.msra.mxu0 %v1681
      %1792 = vmatprep.subr.mxu0 0.0
      %1793 = vmatpush1.msra.mxu0 %v1782
      %1794 = vmatprep.subr.mxu0 0.0
      %1795 = vmatpush1.msra.mxu0 0.0
      %1796 = vmatprep.subr.mxu0 0.0
      %1797 = vmatpush1.msra.mxu0 0.0
      %1798 = vmatprep.subr.mxu0 0.0
      %1799 = vmatpush1.msra.mxu0 0.0
      %1800 = vmatprep.subr.mxu0 0.0
      %1801 = vmatpush1.msra.mxu0 0.0
      %1802 = vmatprep.subr.mxu0 0.0
      %1803 = vmatpush1.msra.mxu0 0.0
      %1804 = vmatprep.subr.mxu0 0.0
      %1805 = vmatpush1.msra.mxu0 0.0
      %1806 = vmatprep.subr.mxu0 0.0
      %1807 = vmatpush1.msra.mxu0 0.0
      %1808 = vmatprep.subr.mxu0 0.0
      %1809 = vmatpush1.msra.mxu0 0.0
      %1810 = vmatprep.subr.mxu0 0.0
      %1811 = vmatpush1.msra.mxu0 0.0
      %1812 = vmatprep.subr.mxu0 0.0
      %1813 = vmatpush1.msra.mxu0 0.0
      %1814 = vmatprep.subr.mxu0 0.0
      %1815 = vmatpush1.msra.mxu0 0.0
      %1816 = vmatprep.subr.mxu0 0.0
      %1817 = vmatpush1.msra.mxu0 0.0
      %1818 = vmatprep.subr.mxu0 0.0
      %1819 = vmatpush1.msra.mxu0 0.0
      %1820 = vmatprep.subr.mxu0 0.0
      %1821 = vmatpush1.msra.mxu0 0.0
      %1822 = vmatprep.subr.mxu0 0.0
      %1823 = vmatpush1.msra.mxu0 0.0
      %1824 = vmatprep.subr.mxu0 0.0
      %1825 = vmatpush1.msra.mxu0 0.0
      %1826 = vmatprep.subr.mxu0 0.0
      %1827 = vmatpush1.msra.mxu0 0.0
      %1828 = vmatprep.subr.mxu0 0.0
      %1829 = vmatpush1.msra.mxu0 0.0
      %1830 = vmatprep.subr.mxu0 0.0
      %1831 = vmatpush1.msra.mxu0 0.0
      %1832 = vmatprep.subr.mxu0 0.0
      %1833 = vmatpush1.msra.mxu0 0.0
      %1834 = vmatprep.subr.mxu0 0.0
      %1835 = vmatpush1.msra.mxu0 0.0
      %1836 = vmatprep.subr.mxu0 0.0
      %1837 = vmatpush1.msra.mxu0 0.0
      %1838 = vmatprep.subr.mxu0 0.0
      %1839 = vmatpush1.msra.mxu0 0.0
      %1840 = vmatprep.subr.mxu0 0.0
      %1841 = vmatpush1.msra.mxu0 0.0
      %1842 = vmatprep.subr.mxu0 0.0
      %1843 = vmatpush1.msra.mxu0 0.0
      %1844 = vmatprep.subr.mxu0 0.0
      %1845 = vmatpush1.msra.mxu0 0.0
      %1846 = vmatprep.subr.mxu0 0.0
      %1847 = vmatpush1.msra.mxu0 0.0
      %1848 = vmatprep.mubr.f32.mxu0 0.0
      %1849 = vmatmul.mubr.f32.gmra.mrb[0].mxu0 %v1685
      %v1850 = vpop.f32.mrb[0].mxu0
      %v1851 = vadd.f32 0.0, %v1850
      %v1852 = vpop.f32.mrb[0].mxu0
      %1853 = vmatprep.mubr.f32.mxu0 0.0
      %1854 = vmatmul.mubr.f32.gmra.mrb[0].mxu0 %v1688
      %v1855 = vpop.f32.mrb[0].mxu0
      %v1856 = vadd.f32 0.0, %v1855
      %v1857 = vpop.f32.mrb[0].mxu0
      %1858 = vmatprep.mubr.f32.mxu0 0.0
      %1859 = vmatmul.mubr.f32.gmra.mrb[0].mxu0 %v1691
      %v1860 = vpop.f32.mrb[0].mxu0
      %v1861 = vadd.f32 0.0, %v1860
      %v1862 = vpop.f32.mrb[0].mxu0
      %1863 = vmatprep.mubr.f32.mxu0 0.0
      %1864 = vmatmul.mubr.f32.gmra.mrb[0].mxu0 %v1694
      %v1865 = vpop.f32.mrb[0].mxu0
      %v1866 = vadd.f32 0.0, %v1865
      %v1867 = vpop.f32.mrb[0].mxu0
      %1868 = vmatprep.mubr.f32.mxu0 0.0
      %1869 = vmatmul.mubr.f32.gmra.mrb[0].mxu0 %v1697
      %v1870 = vpop.f32.mrb[0].mxu0
      %v1871 = vadd.f32 0.0, %v1870
      %v1872 = vpop.f32.mrb[0].mxu0
      %1873 = vmatprep.mubr.f32.mxu0 0.0
      %1874 = vmatmul.mubr.f32.gmra.mrb[0].mxu0 %v1700
      %v1875 = vpop.f32.mrb[0].mxu0
      %v1876 = vadd.f32 0.0, %v1875
      %v1877 = vpop.f32.mrb[0].mxu0
      %1878 = vmatprep.mubr.f32.mxu0 0.0
      %1879 = vmatmul.mubr.f32.gmra.mrb[0].mxu0 %v1703
      %v1880 = vpop.f32.mrb[0].mxu0
      %v1881 = vadd.f32 0.0, %v1880
      %v1882 = vpop.f32.mrb[0].mxu0
      %1883 = vmatprep.mubr.f32.mxu0 0.0
      %1884 = vmatmul.mubr.f32.gmra.mrb[0].mxu0 %v1706
      %v1885 = vpop.f32.mrb[0].mxu0
      %v1886 = vadd.f32 0.0, %v1885
      %v1887 = vpop.f32.mrb[0].mxu0
      %1888 = vmatprep.mubr.f32.mxu0 0.0
      %1889 = vmatmul.mubr.f32.gmra.mrb[0].mxu0 %v1709
      %v1890 = vpop.f32.mrb[0].mxu0
      %v1891 = vadd.f32 0.0, %v1890
      %v1892 = vpop.f32.mrb[0].mxu0
      %1893 = vmatprep.mubr.f32.mxu0 0.0
      %1894 = vmatmul.mubr.f32.gmra.mrb[0].mxu0 %v1712
      %v1895 = vpop.f32.mrb[0].mxu0
      %v1896 = vadd.f32 0.0, %v1895
      %v1897 = vpop.f32.mrb[0].mxu0
      %1898 = vmatprep.mubr.f32.mxu0 0.0
      %1899 = vmatmul.mubr.f32.gmra.mrb[0].mxu0 %v1715
      %v1900 = vpop.f32.mrb[0].mxu0
      %v1901 = vadd.f32 0.0, %v1900
      %v1902 = vpop.f32.mrb[0].mxu0
      %1903 = vmatprep.mubr.f32.mxu0 0.0
      %1904 = vmatmul.mubr.f32.gmra.mrb[0].mxu0 %v1718
      %v1905 = vpop.f32.mrb[0].mxu0
      %v1906 = vadd.f32 0.0, %v1905
      %v1907 = vpop.f32.mrb[0].mxu0
      %1908 = vmatprep.mubr.f32.mxu0 0.0
      %1909 = vmatmul.mubr.f32.gmra.mrb[0].mxu0 %v1721
      %v1910 = vpop.f32.mrb[0].mxu0
      %v1911 = vadd.f32 0.0, %v1910
      %v1912 = vpop.f32.mrb[0].mxu0
      %1913 = vmatprep.mubr.f32.mxu0 0.0
      %1914 = vmatmul.mubr.f32.gmra.mrb[0].mxu0 %v1724
      %v1915 = vpop.f32.mrb[0].mxu0
      %v1916 = vadd.f32 0.0, %v1915
      %v1917 = vpop.f32.mrb[0].mxu0
      %1918 = vmatprep.mubr.f32.mxu0 0.0
      %1919 = vmatmul.mubr.f32.gmra.mrb[0].mxu0 %v1727
      %v1920 = vpop.f32.mrb[0].mxu0
      %v1921 = vadd.f32 0.0, %v1920
      %v1922 = vpop.f32.mrb[0].mxu0
      %1923 = vmatprep.mubr.f32.mxu0 0.0
      %1924 = vmatmul.mubr.f32.gmra.mrb[0].mxu0 %v1730
      %v1925 = vpop.f32.mrb[0].mxu0
      %v1926 = vadd.f32 0.0, %v1925
      %v1927 = vpop.f32.mrb[0].mxu0
      %1928 = vmatprep.mubr.f32.mxu0 0.0
      %1929 = vmatmul.mubr.f32.gmra.mrb[0].mxu0 %v1733
      %v1930 = vpop.f32.mrb[0].mxu0
      %v1931 = vadd.f32 0.0, %v1930
      %v1932 = vpop.f32.mrb[0].mxu0
      %1933 = vmatprep.mubr.f32.mxu0 0.0
      %1934 = vmatmul.mubr.f32.gmra.mrb[0].mxu0 %v1736
      %v1935 = vpop.f32.mrb[0].mxu0
      %v1936 = vadd.f32 0.0, %v1935
      %v1937 = vpop.f32.mrb[0].mxu0
      %1938 = vmatprep.mubr.f32.mxu0 0.0
      %1939 = vmatmul.mubr.f32.gmra.mrb[0].mxu0 %v1739
      %v1940 = vpop.f32.mrb[0].mxu0
      %v1941 = vadd.f32 0.0, %v1940
      %v1942 = vpop.f32.mrb[0].mxu0
      %1943 = vmatprep.mubr.f32.mxu0 0.0
      %1944 = vmatmul.mubr.f32.gmra.mrb[0].mxu0 %v1742
      %v1945 = vpop.f32.mrb[0].mxu0
      %v1946 = vadd.f32 0.0, %v1945
      %v1947 = vpop.f32.mrb[0].mxu0
      %1948 = vmatprep.mubr.f32.mxu0 0.0
      %1949 = vmatmul.mubr.f32.gmra.mrb[0].mxu0 %v1745
      %v1950 = vpop.f32.mrb[0].mxu0
      %v1951 = vadd.f32 0.0, %v1950
      %v1952 = vpop.f32.mrb[0].mxu0
      %1953 = vmatprep.mubr.f32.mxu0 0.0
      %1954 = vmatmul.mubr.f32.gmra.mrb[0].mxu0 %v1748
      %v1955 = vpop.f32.mrb[0].mxu0
      %v1956 = vadd.f32 0.0, %v1955
      %v1957 = vpop.f32.mrb[0].mxu0
      %1958 = vmatprep.mubr.f32.mxu0 0.0
      %1959 = vmatmul.mubr.f32.gmra.mrb[0].mxu0 %v1751
      %v1960 = vpop.f32.mrb[0].mxu0
      %v1961 = vadd.f32 0.0, %v1960
      %v1962 = vpop.f32.mrb[0].mxu0
      %1963 = vmatprep.mubr.f32.mxu0 0.0
      %1964 = vmatmul.mubr.f32.gmra.mrb[0].mxu0 %v1754
      %v1965 = vpop.f32.mrb[0].mxu0
      %v1966 = vadd.f32 0.0, %v1965
      %v1967 = vpop.f32.mrb[0].mxu0
      %1968 = vmatprep.mubr.f32.mxu0 0.0
      %1969 = vmatmul.mubr.f32.gmra.mrb[0].mxu0 %v1757
      %v1970 = vpop.f32.mrb[0].mxu0
      %v1971 = vadd.f32 0.0, %v1970
      %v1972 = vpop.f32.mrb[0].mxu0
      %1973 = vmatprep.mubr.f32.mxu0 0.0
      %1974 = vmatmul.mubr.f32.gmra.mrb[0].mxu0 %v1760
      %v1975 = vpop.f32.mrb[0].mxu0
      %v1976 = vadd.f32 0.0, %v1975
      %v1977 = vpop.f32.mrb[0].mxu0
      %1978 = vmatprep.mubr.f32.mxu0 0.0
      %1979 = vmatmul.mubr.f32.gmra.mrb[0].mxu0 %v1763
      %v1980 = vpop.f32.mrb[0].mxu0
      %v1981 = vadd.f32 0.0, %v1980
      %v1982 = vpop.f32.mrb[0].mxu0
      %1983 = vmatprep.mubr.f32.mxu0 0.0
      %1984 = vmatmul.mubr.f32.gmra.mrb[0].mxu0 %v1766
      %v1985 = vpop.f32.mrb[0].mxu0
      %v1986 = vadd.f32 0.0, %v1985
      %v1987 = vpop.f32.mrb[0].mxu0
      %1988 = vmatprep.mubr.f32.mxu0 0.0
      %1989 = vmatmul.mubr.f32.gmra.mrb[0].mxu0 %v1769
      %v1990 = vpop.f32.mrb[0].mxu0
      %v1991 = vadd.f32 0.0, %v1990
      %v1992 = vpop.f32.mrb[0].mxu0
      %1993 = vmatprep.mubr.f32.mxu0 0.0
      %1994 = vmatmul.mubr.f32.gmra.mrb[0].mxu0 %v1772
      %v1995 = vpop.f32.mrb[0].mxu0
      %v1996 = vadd.f32 0.0, %v1995
      %v1997 = vpop.f32.mrb[0].mxu0
      %1998 = vmatprep.mubr.f32.mxu0 0.0
      %1999 = vmatmul.mubr.f32.gmra.mrb[0].mxu0 %v1775
      %v2000 = vpop.f32.mrb[0].mxu0
      %v2001 = vadd.f32 0.0, %v2000
      %v2002 = vpop.f32.mrb[0].mxu0
      %2003 = vmatprep.mubr.f32.mxu0 0.0
      %2004 = vmatmul.mubr.f32.gmra.mrb[0].mxu0 %v1778
      %v2005 = vpop.f32.mrb[0].mxu0
      %v2006 = vadd.f32 0.0, %v2005
      %v2007 = vpop.f32.mrb[0].mxu0
      %2008 = vdwg.mxu0
      %v2009 = vmax.f32 %v1851, 0.0
      %v2010 = vmax.f32 %v1856, 0.0
      %v2011 = vmax.f32 %v1861, 0.0
      %v2012 = vmax.f32 %v1866, 0.0
      %v2013 = vmax.f32 %v1871, 0.0
      %v2014 = vmax.f32 %v1876, 0.0
      %v2015 = vmax.f32 %v1881, 0.0
      %v2016 = vmax.f32 %v1886, 0.0
      %v2017 = vmax.f32 %v1891, 0.0
      %v2018 = vmax.f32 %v1896, 0.0
      %v2019 = vmax.f32 %v1901, 0.0
      %v2020 = vmax.f32 %v1906, 0.0
      %v2021 = vmax.f32 %v1911, 0.0
      %v2022 = vmax.f32 %v1916, 0.0
      %v2023 = vmax.f32 %v1921, 0.0
      %v2024 = vmax.f32 %v1926, 0.0
      %v2025 = vmax.f32 %v1931, 0.0
      %v2026 = vmax.f32 %v1936, 0.0
      %v2027 = vmax.f32 %v1941, 0.0
      %v2028 = vmax.f32 %v1946, 0.0
      %v2029 = vmax.f32 %v1951, 0.0
      %v2030 = vmax.f32 %v1956, 0.0
      %v2031 = vmax.f32 %v1961, 0.0
      %v2032 = vmax.f32 %v1966, 0.0
      %v2033 = vmax.f32 %v1971, 0.0
      %v2034 = vmax.f32 %v1976, 0.0
      %v2035 = vmax.f32 %v1981, 0.0
      %v2036 = vmax.f32 %v1986, 0.0
      %v2037 = vmax.f32 %v1991, 0.0
      %v2038 = vmax.f32 %v1996, 0.0
      %v2039 = vmax.f32 %v2001, 0.0
      %v2040 = vmax.f32 %v2006, 0.0
      %v2041 = vld [vmem:[%s2] sm:$0xf]
      %v2043 = vsel %vm203, %v2009, 0
      %v2046 = vsel %vm203, %v2010, 0
      %v2049 = vsel %vm203, %v2011, 0
      %v2052 = vsel %vm203, %v2012, 0
      %v2055 = vsel %vm203, %v2013, 0
      %v2058 = vsel %vm203, %v2014, 0
      %v2061 = vsel %vm203, %v2015, 0
      %v2064 = vsel %vm203, %v2016, 0
      %v2067 = vsel %vm203, %v2017, 0
      %v2070 = vsel %vm203, %v2018, 0
      %v2073 = vsel %vm203, %v2019, 0
      %v2076 = vsel %vm203, %v2020, 0
      %v2079 = vsel %vm203, %v2021, 0
      %v2082 = vsel %vm203, %v2022, 0
      %v2085 = vsel %vm203, %v2023, 0
      %v2088 = vsel %vm203, %v2024, 0
      %v2091 = vsel %vm203, %v2025, 0
      %v2094 = vsel %vm203, %v2026, 0
      %v2097 = vsel %vm203, %v2027, 0
      %v2100 = vsel %vm203, %v2028, 0
      %v2103 = vsel %vm203, %v2029, 0
      %v2106 = vsel %vm203, %v2030, 0
      %v2109 = vsel %vm203, %v2031, 0
      %v2112 = vsel %vm203, %v2032, 0
      %v2115 = vsel %vm203, %v2033, 0
      %v2118 = vsel %vm203, %v2034, 0
      %v2121 = vsel %vm203, %v2035, 0
      %v2124 = vsel %vm203, %v2036, 0
      %v2127 = vsel %vm203, %v2037, 0
      %v2130 = vsel %vm203, %v2038, 0
      %v2133 = vsel %vm203, %v2039, 0
      %v2136 = vsel %vm203, %v2040, 0
      %v2139 = vsel %vm1780, %v2041, 0
      %2141 = vmatprep.subr.mxu0 0.0
      %2142 = vmatpush1.msra.mxu0 %v2139
      %2143 = vmatprep.subr.mxu0 0.0
      %2144 = vmatpush1.msra.mxu0 0.0
      %2145 = vmatprep.subr.mxu0 0.0
      %2146 = vmatpush1.msra.mxu0 0.0
      %2147 = vmatprep.subr.mxu0 0.0
      %2148 = vmatpush1.msra.mxu0 0.0
      %2149 = vmatprep.subr.mxu0 0.0
      %2150 = vmatpush1.msra.mxu0 0.0
      %2151 = vmatprep.subr.mxu0 0.0
      %2152 = vmatpush1.msra.mxu0 0.0
      %2153 = vmatprep.subr.mxu0 0.0
      %2154 = vmatpush1.msra.mxu0 0.0
      %2155 = vmatprep.subr.mxu0 0.0
      %2156 = vmatpush1.msra.mxu0 0.0
      %2157 = vmatprep.subr.mxu0 0.0
      %2158 = vmatpush1.msra.mxu0 0.0
      %2159 = vmatprep.subr.mxu0 0.0
      %2160 = vmatpush1.msra.mxu0 0.0
      %2161 = vmatprep.subr.mxu0 0.0
      %2162 = vmatpush1.msra.mxu0 0.0
      %2163 = vmatprep.subr.mxu0 0.0
      %2164 = vmatpush1.msra.mxu0 0.0
      %2165 = vmatprep.subr.mxu0 0.0
      %2166 = vmatpush1.msra.mxu0 0.0
      %2167 = vmatprep.subr.mxu0 0.0
      %2168 = vmatpush1.msra.mxu0 0.0
      %2169 = vmatprep.subr.mxu0 0.0
      %2170 = vmatpush1.msra.mxu0 0.0
      %2171 = vmatprep.subr.mxu0 0.0
      %2172 = vmatpush1.msra.mxu0 0.0
      %2173 = vmatprep.subr.mxu0 0.0
      %2174 = vmatpush1.msra.mxu0 0.0
      %2175 = vmatprep.subr.mxu0 0.0
      %2176 = vmatpush1.msra.mxu0 0.0
      %2177 = vmatprep.subr.mxu0 0.0
      %2178 = vmatpush1.msra.mxu0 0.0
      %2179 = vmatprep.subr.mxu0 0.0
      %2180 = vmatpush1.msra.mxu0 0.0
      %2181 = vmatprep.subr.mxu0 0.0
      %2182 = vmatpush1.msra.mxu0 0.0
      %2183 = vmatprep.subr.mxu0 0.0
      %2184 = vmatpush1.msra.mxu0 0.0
      %2185 = vmatprep.subr.mxu0 0.0
      %2186 = vmatpush1.msra.mxu0 0.0
      %2187 = vmatprep.subr.mxu0 0.0
      %2188 = vmatpush1.msra.mxu0 0.0
      %2189 = vmatprep.subr.mxu0 0.0
      %2190 = vmatpush1.msra.mxu0 0.0
      %2191 = vmatprep.subr.mxu0 0.0
      %2192 = vmatpush1.msra.mxu0 0.0
      %2193 = vmatprep.subr.mxu0 0.0
      %2194 = vmatpush1.msra.mxu0 0.0
      %2195 = vmatprep.subr.mxu0 0.0
      %2196 = vmatpush1.msra.mxu0 0.0
      %2197 = vmatprep.subr.mxu0 0.0
      %2198 = vmatpush1.msra.mxu0 0.0
      %2199 = vmatprep.subr.mxu0 0.0
      %2200 = vmatpush1.msra.mxu0 0.0
      %2201 = vmatprep.subr.mxu0 0.0
      %2202 = vmatpush1.msra.mxu0 0.0
      %2203 = vmatprep.subr.mxu0 0.0
      %2204 = vmatpush1.msra.mxu0 0.0
      %2205 = vmatprep.mubr.f32.mxu0 0.0
      %2206 = vmatmul.mubr.f32.gmra.mrb[0].mxu0 %v2043
      %v2207 = vpop.f32.mrb[0].mxu0
      %v2208 = vadd.f32 0.0, %v2207
      %v2209 = vpop.f32.mrb[0].mxu0
      %2210 = vmatprep.mubr.f32.mxu0 0.0
      %2211 = vmatmul.mubr.f32.gmra.mrb[0].mxu0 %v2046
      %v2212 = vpop.f32.mrb[0].mxu0
      %v2213 = vadd.f32 0.0, %v2212
      %v2214 = vpop.f32.mrb[0].mxu0
      %2215 = vmatprep.mubr.f32.mxu0 0.0
      %2216 = vmatmul.mubr.f32.gmra.mrb[0].mxu0 %v2049
      %v2217 = vpop.f32.mrb[0].mxu0
      %v2218 = vadd.f32 0.0, %v2217
      %v2219 = vpop.f32.mrb[0].mxu0
      %2220 = vmatprep.mubr.f32.mxu0 0.0
      %2221 = vmatmul.mubr.f32.gmra.mrb[0].mxu0 %v2052
      %v2222 = vpop.f32.mrb[0].mxu0
      %v2223 = vadd.f32 0.0, %v2222
      %v2224 = vpop.f32.mrb[0].mxu0
      %2225 = vmatprep.mubr.f32.mxu0 0.0
      %2226 = vmatmul.mubr.f32.gmra.mrb[0].mxu0 %v2055
      %v2227 = vpop.f32.mrb[0].mxu0
      %v2228 = vadd.f32 0.0, %v2227
      %v2229 = vpop.f32.mrb[0].mxu0
      %2230 = vmatprep.mubr.f32.mxu0 0.0
      %2231 = vmatmul.mubr.f32.gmra.mrb[0].mxu0 %v2058
      %v2232 = vpop.f32.mrb[0].mxu0
      %v2233 = vadd.f32 0.0, %v2232
      %v2234 = vpop.f32.mrb[0].mxu0
      %2235 = vmatprep.mubr.f32.mxu0 0.0
      %2236 = vmatmul.mubr.f32.gmra.mrb[0].mxu0 %v2061
      %v2237 = vpop.f32.mrb[0].mxu0
      %v2238 = vadd.f32 0.0, %v2237
      %v2239 = vpop.f32.mrb[0].mxu0
      %2240 = vmatprep.mubr.f32.mxu0 0.0
      %2241 = vmatmul.mubr.f32.gmra.mrb[0].mxu0 %v2064
      %v2242 = vpop.f32.mrb[0].mxu0
      %v2243 = vadd.f32 0.0, %v2242
      %v2244 = vpop.f32.mrb[0].mxu0
      %2245 = vmatprep.mubr.f32.mxu0 0.0
      %2246 = vmatmul.mubr.f32.gmra.mrb[0].mxu0 %v2067
      %v2247 = vpop.f32.mrb[0].mxu0
      %v2248 = vadd.f32 0.0, %v2247
      %v2249 = vpop.f32.mrb[0].mxu0
      %2250 = vmatprep.mubr.f32.mxu0 0.0
      %2251 = vmatmul.mubr.f32.gmra.mrb[0].mxu0 %v2070
      %v2252 = vpop.f32.mrb[0].mxu0
      %v2253 = vadd.f32 0.0, %v2252
      %v2254 = vpop.f32.mrb[0].mxu0
      %2255 = vmatprep.mubr.f32.mxu0 0.0
      %2256 = vmatmul.mubr.f32.gmra.mrb[0].mxu0 %v2073
      %v2257 = vpop.f32.mrb[0].mxu0
      %v2258 = vadd.f32 0.0, %v2257
      %v2259 = vpop.f32.mrb[0].mxu0
      %2260 = vmatprep.mubr.f32.mxu0 0.0
      %2261 = vmatmul.mubr.f32.gmra.mrb[0].mxu0 %v2076
      %v2262 = vpop.f32.mrb[0].mxu0
      %v2263 = vadd.f32 0.0, %v2262
      %v2264 = vpop.f32.mrb[0].mxu0
      %2265 = vmatprep.mubr.f32.mxu0 0.0
      %2266 = vmatmul.mubr.f32.gmra.mrb[0].mxu0 %v2079
      %v2267 = vpop.f32.mrb[0].mxu0
      %v2268 = vadd.f32 0.0, %v2267
      %v2269 = vpop.f32.mrb[0].mxu0
      %2270 = vmatprep.mubr.f32.mxu0 0.0
      %2271 = vmatmul.mubr.f32.gmra.mrb[0].mxu0 %v2082
      %v2272 = vpop.f32.mrb[0].mxu0
      %v2273 = vadd.f32 0.0, %v2272
      %v2274 = vpop.f32.mrb[0].mxu0
      %2275 = vmatprep.mubr.f32.mxu0 0.0
      %2276 = vmatmul.mubr.f32.gmra.mrb[0].mxu0 %v2085
      %v2277 = vpop.f32.mrb[0].mxu0
      %v2278 = vadd.f32 0.0, %v2277
      %v2279 = vpop.f32.mrb[0].mxu0
      %2280 = vmatprep.mubr.f32.mxu0 0.0
      %2281 = vmatmul.mubr.f32.gmra.mrb[0].mxu0 %v2088
      %v2282 = vpop.f32.mrb[0].mxu0
      %v2283 = vadd.f32 0.0, %v2282
      %v2284 = vpop.f32.mrb[0].mxu0
      %2285 = vmatprep.mubr.f32.mxu0 0.0
      %2286 = vmatmul.mubr.f32.gmra.mrb[0].mxu0 %v2091
      %v2287 = vpop.f32.mrb[0].mxu0
      %v2288 = vadd.f32 0.0, %v2287
      %v2289 = vpop.f32.mrb[0].mxu0
      %2290 = vmatprep.mubr.f32.mxu0 0.0
      %2291 = vmatmul.mubr.f32.gmra.mrb[0].mxu0 %v2094
      %v2292 = vpop.f32.mrb[0].mxu0
      %v2293 = vadd.f32 0.0, %v2292
      %v2294 = vpop.f32.mrb[0].mxu0
      %2295 = vmatprep.mubr.f32.mxu0 0.0
      %2296 = vmatmul.mubr.f32.gmra.mrb[0].mxu0 %v2097
      %v2297 = vpop.f32.mrb[0].mxu0
      %v2298 = vadd.f32 0.0, %v2297
      %v2299 = vpop.f32.mrb[0].mxu0
      %2300 = vmatprep.mubr.f32.mxu0 0.0
      %2301 = vmatmul.mubr.f32.gmra.mrb[0].mxu0 %v2100
      %v2302 = vpop.f32.mrb[0].mxu0
      %v2303 = vadd.f32 0.0, %v2302
      %v2304 = vpop.f32.mrb[0].mxu0
      %2305 = vmatprep.mubr.f32.mxu0 0.0
      %2306 = vmatmul.mubr.f32.gmra.mrb[0].mxu0 %v2103
      %v2307 = vpop.f32.mrb[0].mxu0
      %v2308 = vadd.f32 0.0, %v2307
      %v2309 = vpop.f32.mrb[0].mxu0
      %2310 = vmatprep.mubr.f32.mxu0 0.0
      %2311 = vmatmul.mubr.f32.gmra.mrb[0].mxu0 %v2106
      %v2312 = vpop.f32.mrb[0].mxu0
      %v2313 = vadd.f32 0.0, %v2312
      %v2314 = vpop.f32.mrb[0].mxu0
      %2315 = vmatprep.mubr.f32.mxu0 0.0
      %2316 = vmatmul.mubr.f32.gmra.mrb[0].mxu0 %v2109
      %v2317 = vpop.f32.mrb[0].mxu0
      %v2318 = vadd.f32 0.0, %v2317
      %v2319 = vpop.f32.mrb[0].mxu0
      %2320 = vmatprep.mubr.f32.mxu0 0.0
      %2321 = vmatmul.mubr.f32.gmra.mrb[0].mxu0 %v2112
      %v2322 = vpop.f32.mrb[0].mxu0
      %v2323 = vadd.f32 0.0, %v2322
      %v2324 = vpop.f32.mrb[0].mxu0
      %2325 = vmatprep.mubr.f32.mxu0 0.0
      %2326 = vmatmul.mubr.f32.gmra.mrb[0].mxu0 %v2115
      %v2327 = vpop.f32.mrb[0].mxu0
      %v2328 = vadd.f32 0.0, %v2327
      %v2329 = vpop.f32.mrb[0].mxu0
      %2330 = vmatprep.mubr.f32.mxu0 0.0
      %2331 = vmatmul.mubr.f32.gmra.mrb[0].mxu0 %v2118
      %v2332 = vpop.f32.mrb[0].mxu0
      %v2333 = vadd.f32 0.0, %v2332
      %v2334 = vpop.f32.mrb[0].mxu0
      %2335 = vmatprep.mubr.f32.mxu0 0.0
      %2336 = vmatmul.mubr.f32.gmra.mrb[0].mxu0 %v2121
      %v2337 = vpop.f32.mrb[0].mxu0
      %v2338 = vadd.f32 0.0, %v2337
      %v2339 = vpop.f32.mrb[0].mxu0
      %2340 = vmatprep.mubr.f32.mxu0 0.0
      %2341 = vmatmul.mubr.f32.gmra.mrb[0].mxu0 %v2124
      %v2342 = vpop.f32.mrb[0].mxu0
      %v2343 = vadd.f32 0.0, %v2342
      %v2344 = vpop.f32.mrb[0].mxu0
      %2345 = vmatprep.mubr.f32.mxu0 0.0
      %2346 = vmatmul.mubr.f32.gmra.mrb[0].mxu0 %v2127
      %v2347 = vpop.f32.mrb[0].mxu0
      %v2348 = vadd.f32 0.0, %v2347
      %v2349 = vpop.f32.mrb[0].mxu0
      %2350 = vmatprep.mubr.f32.mxu0 0.0
      %2351 = vmatmul.mubr.f32.gmra.mrb[0].mxu0 %v2130
      %v2352 = vpop.f32.mrb[0].mxu0
      %v2353 = vadd.f32 0.0, %v2352
      %v2354 = vpop.f32.mrb[0].mxu0
      %2355 = vmatprep.mubr.f32.mxu0 0.0
      %2356 = vmatmul.mubr.f32.gmra.mrb[0].mxu0 %v2133
      %v2357 = vpop.f32.mrb[0].mxu0
      %v2358 = vadd.f32 0.0, %v2357
      %v2359 = vpop.f32.mrb[0].mxu0
      %2360 = vmatprep.mubr.f32.mxu0 0.0
      %2361 = vmatmul.mubr.f32.gmra.mrb[0].mxu0 %v2136
      %v2362 = vpop.f32.mrb[0].mxu0
      %v2363 = vadd.f32 0.0, %v2362
      %v2364 = vpop.f32.mrb[0].mxu0
      %2365 = vdwg.mxu0
      %v2366 = vadd.f32 %v171, %v2208
      %v2367 = vadd.f32 %v172, %v2213
      %v2368 = vadd.f32 %v173, %v2218
      %v2369 = vadd.f32 %v174, %v2223
      %v2370 = vadd.f32 %v175, %v2228
      %v2371 = vadd.f32 %v176, %v2233
      %v2372 = vadd.f32 %v177, %v2238
      %v2373 = vadd.f32 %v178, %v2243
      %v2374 = vadd.f32 %v179, %v2248
      %v2375 = vadd.f32 %v180, %v2253
      %v2376 = vadd.f32 %v181, %v2258
      %v2377 = vadd.f32 %v182, %v2263
      %v2378 = vadd.f32 %v183, %v2268
      %v2379 = vadd.f32 %v184, %v2273
      %v2380 = vadd.f32 %v185, %v2278
      %v2381 = vadd.f32 %v186, %v2283
      %v2382 = vadd.f32 %v187, %v2288
      %v2383 = vadd.f32 %v188, %v2293
      %v2384 = vadd.f32 %v189, %v2298
      %v2385 = vadd.f32 %v190, %v2303
      %v2386 = vadd.f32 %v191, %v2308
      %v2387 = vadd.f32 %v192, %v2313
      %v2388 = vadd.f32 %v193, %v2318
      %v2389 = vadd.f32 %v194, %v2323
      %v2390 = vadd.f32 %v195, %v2328
      %v2391 = vadd.f32 %v196, %v2333
      %v2392 = vadd.f32 %v197, %v2338
      %v2393 = vadd.f32 %v198, %v2343
      %v2394 = vadd.f32 %v199, %v2348
      %v2395 = vadd.f32 %v200, %v2353
      %v2396 = vadd.f32 %v201, %v2358
      %v2397 = vadd.f32 %v202, %v2363
      %2398 = vst.msk [vmem:[%s170] sm:$0xff] %vm203, %v2366
      %2399 = vst.msk [vmem:[%s170 + $0x8] sm:$0xff] %vm203, %v2367
      %2400 = vst.msk [vmem:[%s170 + $0x10] sm:$0xff] %vm203, %v2368
      %2401 = vst.msk [vmem:[%s170 + $0x18] sm:$0xff] %vm203, %v2369
      %2402 = vst.msk [vmem:[%s170 + $0x20] sm:$0xff] %vm203, %v2370
      %2403 = vst.msk [vmem:[%s170 + $0x28] sm:$0xff] %vm203, %v2371
      %2404 = vst.msk [vmem:[%s170 + $0x30] sm:$0xff] %vm203, %v2372
      %2405 = vst.msk [vmem:[%s170 + $0x38] sm:$0xff] %vm203, %v2373
      %2406 = vst.msk [vmem:[%s170 + $0x40] sm:$0xff] %vm203, %v2374
      %2407 = vst.msk [vmem:[%s170 + $0x48] sm:$0xff] %vm203, %v2375
      %2408 = vst.msk [vmem:[%s170 + $0x50] sm:$0xff] %vm203, %v2376
      %2409 = vst.msk [vmem:[%s170 + $0x58] sm:$0xff] %vm203, %v2377
      %2410 = vst.msk [vmem:[%s170 + $0x60] sm:$0xff] %vm203, %v2378
      %2411 = vst.msk [vmem:[%s170 + $0x68] sm:$0xff] %vm203, %v2379
      %2412 = vst.msk [vmem:[%s170 + $0x70] sm:$0xff] %vm203, %v2380
      %2413 = vst.msk [vmem:[%s170 + $0x78] sm:$0xff] %vm203, %v2381
      %2414 = vst.msk [vmem:[%s170 + $0x80] sm:$0xff] %vm203, %v2382
      %2415 = vst.msk [vmem:[%s170 + $0x88] sm:$0xff] %vm203, %v2383
      %2416 = vst.msk [vmem:[%s170 + $0x90] sm:$0xff] %vm203, %v2384
      %2417 = vst.msk [vmem:[%s170 + $0x98] sm:$0xff] %vm203, %v2385
      %2418 = vst.msk [vmem:[%s170 + $0xa0] sm:$0xff] %vm203, %v2386
      %2419 = vst.msk [vmem:[%s170 + $0xa8] sm:$0xff] %vm203, %v2387
      %2420 = vst.msk [vmem:[%s170 + $0xb0] sm:$0xff] %vm203, %v2388
      %2421 = vst.msk [vmem:[%s170 + $0xb8] sm:$0xff] %vm203, %v2389
      %2422 = vst.msk [vmem:[%s170 + $0xc0] sm:$0xff] %vm203, %v2390
      %2423 = vst.msk [vmem:[%s170 + $0xc8] sm:$0xff] %vm203, %v2391
      %2424 = vst.msk [vmem:[%s170 + $0xd0] sm:$0xff] %vm203, %v2392
      %2425 = vst.msk [vmem:[%s170 + $0xd8] sm:$0xff] %vm203, %v2393
      %2426 = vst.msk [vmem:[%s170 + $0xe0] sm:$0xff] %vm203, %v2394
      %2427 = vst.msk [vmem:[%s170 + $0xe8] sm:$0xff] %vm203, %v2395
      %2428 = vst.msk [vmem:[%s170 + $0xf0] sm:$0xff] %vm203, %v2396
      %2429 = vst.msk [vmem:[%s170 + $0xf8] sm:$0xff] %vm203, %v2397
      %p2430 = scmp.lt.s32.totalorder %s14, 1
      %s2431 = scalar_select %p2430, %s14, 1
      %s2432 = smul.addr %s2431, 32
      %s2433 = smul.addr %s2432, 8
      %s2434 = scalar_lea.vmem %s3, %s2433
      // Predicated region
      $region33: #{tpu_custom_call.1} parent=31 // pred_check
        %p2435 = pneg %p100
      $region34: #{tpu_custom_call.1} parent=31 // pred_check_branch
        %2437 = sbr.rel (%p2435) target = $region36
      $region35: #{tpu_custom_call.1} parent=31 // pred_region
        _
      $region36: #{tpu_custom_call.1} parent=31 // pred_fallthru
        _
    $region32: #{tpu_custom_call.1} parent=5 // pred_fallthru
      _
    %p2438 = scmp.le.s32.totalorder 2, %s9
    // Predicated region
    $region37: #{tpu_custom_call.1} parent=5 // pred_check
      %p2439 = pneg %p2438
    $region38: #{tpu_custom_call.1} parent=5 // pred_check_branch
      %2441 = sbr.rel (%p2439) target = $region40
    $region39: #{tpu_custom_call.1} parent=5 // pred_region
      %s2442 = ssub.s32 %s9, 2
      // Predicated region
      $region41: #{tpu_custom_call.1} parent=39 // pred_check
        %p2443 = pneg %p106
      $region42: #{tpu_custom_call.1} parent=39 // pred_check_branch
        %2445 = sbr.rel (%p2443) target = $region44
      $region43: #{tpu_custom_call.1} parent=39 // pred_region
        %p2446 = scmp.lt.s32.totalorder %s15, 1
        %s2447 = scalar_select %p2446, %s15, 1
        %s2448 = smul.addr %s2447, 32
        %s2449 = smul.addr %s2448, 8
        %s2450 = scalar_lea.vmem %s3, %s2449
      $region44: #{tpu_custom_call.1} parent=39 // pred_fallthru
        _
    $region40: #{tpu_custom_call.1} parent=5 // pred_fallthru
      _
  $region6: #{tpu_custom_call.1} parent=0 // loop_footer
    %s13 = sadd.s32 1, %s9
  $region7: #{tpu_custom_call.1} parent=0 // loop_footer_branch
    %8 = sbr.rel target = $region3
  $region8: #{tpu_custom_call.1} parent=0 // loop_exit
    _

</llo_original>
